<compile_context>
chip_gen: v7x
topology: tpu7x:2x2x1
jax: 0.10.0
libtpu: 0.0.40
codegen_flags: <defaults>
</compile_context>

<pallas_src>
import functools

import jax
import jax.numpy as jnp
from jax.experimental import pallas as pl
from jax.experimental.pallas import tpu as pltpu


def _round_up(x, m):
    return ((x + m - 1) // m) * m


# ----------------------------------------------------------------------------
# Kernel body: one grid step == one LSTM layer (+ fused FC epilogue)
# ----------------------------------------------------------------------------
def _make_kernel(T, B_pad, D_feat, H, H_pad, G_pad, proj_tc):
    """Ref shapes seen by the kernel:
      x_hbm_ref : (T, B_pad, D_feat)   padded, time-major input, HBM (pl.ANY)
      w_ih_ref  : (1, D_feat, G_pad)   this layer's input weight (pre-transposed)
      w_hh_ref  : (1, H_pad, G_pad)    this layer's recurrent weight
      b_ref     : (1, 1, G_pad)        this layer's combined bias (b_ih + b_hh)
      w_fc_ref  : (H_pad, C_pad)
      b_fc_ref  : (1, C_pad)
      out_ref   : (1, B_pad, C_pad)    fc(h_last) of this layer
    Scratch (persists across grid steps):
      seq_buf   : (T, B_pad, D_feat)   layer input / output hidden sequence
      gates_buf : (T, B_pad, G_pad)    hoisted input projections
      h_sc,c_sc : (B_pad, H_pad)
    """

    def kernel(x_hbm_ref, w_ih_ref, w_hh_ref, b_ref, w_fc_ref, b_fc_ref,
               out_ref, seq_buf, gates_buf, h_sc, c_sc):
        layer = pl.program_id(0)

        # Layer 0: DMA the padded time-major input into the sequence slab once.
        # x stays in HBM for the rest of the kernel (not VMEM-resident).
        @pl.when(layer == 0)
        def _():
            pltpu.sync_copy(x_hbm_ref, seq_buf)

        b_row = b_ref[0]                                    # (1, G_pad)

        # ---- Hoisted input projection: one MXU matmul per time-chunk ----
        for t0 in range(0, T, proj_tc):
            tcc = min(proj_tc, T - t0)
            xc = seq_buf[t0:t0 + tcc].reshape(tcc * B_pad, D_feat)
            gc = jnp.dot(xc, w_ih_ref[0],
                         preferred_element_type=jnp.float32) + b_row
            gates_buf[t0:t0 + tcc] = gc.reshape(tcc, B_pad, G_pad)

        # h_0 = c_0 = 0, as in the module's forward.
        h_sc[...] = jnp.zeros_like(h_sc)
        c_sc[...] = jnp.zeros_like(c_sc)

        # Lane mask marking the cell-candidate ("g") gate; hoisted out of the loop.
        lane = jax.lax.broadcasted_iota(jnp.int32, (B_pad, G_pad), 1)
        is_g = (lane >= 2 * H) & (lane < 3 * H)

        def step(t, carry):
            gates = gates_buf[t] + jnp.dot(h_sc[...], w_hh_ref[0],
                                           preferred_element_type=jnp.float32)
            # Single EUP pass over G_pad lanes: tanh(x) == 2*sigmoid(2x) - 1.
            s = jax.nn.sigmoid(jnp.where(is_g, 2.0 * gates, gates))
            act = jnp.where(is_g, 2.0 * s - 1.0, s)

            if H % 128 == 0:
                # Gate boundaries are lane-tile aligned: clean full-vreg slices.
                i_a = act[:, 0:H]
                f_a = act[:, H:2 * H]
                g_a = act[:, 2 * H:3 * H]
                o_a = act[:, 3 * H:4 * H]
            else:
                # Contiguously packed gates: rotate each gate to lanes [0, H) on the
                # XLU.  Lanes >= H carry bounded garbage that only ever multiplies
                # zero-padded weight rows downstream, so it never leaks into results.
                i_a = act[:, :H_pad]
                f_a = pltpu.roll(act, shift=G_pad - H, axis=1)[:, :H_pad]
                g_a = pltpu.roll(act, shift=G_pad - 2 * H, axis=1)[:, :H_pad]
                o_a = pltpu.roll(act, shift=G_pad - 3 * H, axis=1)[:, :H_pad]

            c_new = f_a * c_sc[...] + i_a * g_a
            h_new = o_a * jnp.tanh(c_new)
            c_sc[...] = c_new
            h_sc[...] = h_new
            if D_feat == H_pad:
                seq_buf[t] = h_new                  # next layer's input
            else:
                seq_buf[t, :, 0:H_pad] = h_new
            return carry

        jax.lax.fori_loop(0, T, step, 0, unroll=min(T, 8))

        # ---- fused FC epilogue on this layer's final hidden state ----
        out_ref[0] = (jnp.dot(h_sc[...], w_fc_ref[...],
                              preferred_element_type=jnp.float32)
                      + b_fc_ref[...])

    return kernel


@functools.lru_cache(maxsize=None)
def _get_forward_fn(num_layers, T, B_pad, D_feat, H, H_pad, G_pad, C_pad):
    proj_tc = max(1, min(T, 512 // max(B_pad, 1)))   # ~512-row projection tiles
    kernel = _make_kernel(T, B_pad, D_feat, H, H_pad, G_pad, proj_tc)

    grid_spec = pltpu.PrefetchScalarGridSpec(
        num_scalar_prefetch=0,
        grid=(num_layers,),
        in_specs=[
            pl.BlockSpec(memory_space=pl.ANY),                       # x, stays in HBM
            pl.BlockSpec((1, D_feat, G_pad), lambda l: (l, 0, 0)),   # w_ih per layer
            pl.BlockSpec((1, H_pad, G_pad), lambda l: (l, 0, 0)),    # w_hh per layer
            pl.BlockSpec((1, 1, G_pad), lambda l: (l, 0, 0)),        # bias per layer
            pl.BlockSpec((H_pad, C_pad), lambda l: (0, 0)),          # fc weight
            pl.BlockSpec((1, C_pad), lambda l: (0, 0)),              # fc bias
        ],
        out_specs=pl.BlockSpec((1, B_pad, C_pad), lambda l: (l, 0, 0)),
        scratch_shapes=[
            pltpu.VMEM((T, B_pad, D_feat), jnp.float32),   # hidden-sequence slab
            pltpu.VMEM((T, B_pad, G_pad), jnp.float32),    # hoisted input projections
            pltpu.VMEM((B_pad, H_pad), jnp.float32),       # h
            pltpu.VMEM((B_pad, H_pad), jnp.float32),       # c
        ],
    )

    f32 = 4
    needed = f32 * (
        2 * (D_feat * G_pad + H_pad * G_pad + G_pad)   # double-buffered layer weights
        + H_pad * C_pad + C_pad                        # fc params (resident)
        + 2 * B_pad * C_pad                            # double-buffered output block
        + T * B_pad * (D_feat + G_pad)                 # seq + gates scratch
        + 2 * B_pad * H_pad                            # h, c
    )
    try:
        cap = int(0.85 * pltpu.get_tpu_info().vmem_capacity_bytes)
    except Exception:  # pragma: no cover - conservative fallback
        cap = 64 * 1024 * 1024
    # TODO(synk): if `needed` ever exceeds `cap` (very long T), switch to a time-chunk
    # grid that streams the inter-layer sequence through HBM instead of capping here.
    vmem_limit = int(min(max(2 * needed, 32 * 1024 * 1024), cap))

    fwd = pl.pallas_call(
        kernel,
        out_shape=jax.ShapeDtypeStruct((num_layers, B_pad, C_pad), jnp.float32),
        grid_spec=grid_spec,
        compiler_params=pltpu.CompilerParams(
            dimension_semantics=("arbitrary",),
            vmem_limit_bytes=vmem_limit),
    )
    return jax.jit(fwd)


# ----------------------------------------------------------------------------
# Wrapper matching MultiLayerLSTM.forward (activation=None -> identity)
# ----------------------------------------------------------------------------
class MultiLayerLSTMPallas:
    def __init__(self, num_classes, input_size, hidden_size, num_layers, key):
        self.num_classes = num_classes
        self.input_size = input_size
        self.hidden_size = hidden_size
        self.num_layers = num_layers

        H, L = hidden_size, num_layers
        self.H_pad = _round_up(H, 128)                 # hidden-state lane width
        self.G_pad = _round_up(4 * H, 128)             # packed-gates lane width
        self.D_feat = max(_round_up(input_size, 128), self.H_pad)
        self.C_pad = _round_up(num_classes, 128)
        Hp, Gp, Df, Cp = self.H_pad, self.G_pad, self.D_feat, self.C_pad

        bound = 1.0 / float(H) ** 0.5
        keys = jax.random.split(key, 4 * L + 2)

        # Raw PyTorch-layout params (gate order [i, f, g, o]) for the reference;
        # padded / pre-transposed / contiguously-packed stacks for the kernel.
        self.raw_params = []
        w_ih_stack = jnp.zeros((L, Df, Gp), jnp.float32)
        w_hh_stack = jnp.zeros((L, Hp, Gp), jnp.float32)
        b_stack = jnp.zeros((L, 1, Gp), jnp.float32)

        k = 0
        for layer in range(L):
            din = input_size if layer == 0 else H
            w_ih = jax.random.uniform(keys[k + 0], (4 * H, din), jnp.float32, -bound, bound)
            w_hh = jax.random.uniform(keys[k + 1], (4 * H, H), jnp.float32, -bound, bound)
            b_ih = jax.random.uniform(keys[k + 2], (4 * H,), jnp.float32, -bound, bound)
            b_hh = jax.random.uniform(keys[k + 3], (4 * H,), jnp.float32, -bound, bound)
            k += 4
            self.raw_params.append((w_ih, w_hh, b_ih, b_hh))

            # Gates packed contiguously in the first 4H lanes (no per-gate slots).
            w_ih_stack = w_ih_stack.at[layer, :din, :4 * H].set(w_ih.T)
            w_hh_stack = w_hh_stack.at[layer, :H, :4 * H].set(w_hh.T)
            b_stack = b_stack.at[layer, 0, :4 * H].set(b_ih + b_hh)

        self.w_ih_stack = w_ih_stack
        self.w_hh_stack = w_hh_stack
        self.b_stack = b_stack

        # fc = nn.Linear(hidden_size, num_classes), pre-transposed + padded
        self.w_fc_raw = jax.random.uniform(keys[k + 0], (num_classes, H),
                                           jnp.float32, -bound, bound)
        self.b_fc_raw = jax.random.uniform(keys[k + 1], (num_classes,),
                                           jnp.float32, -bound, bound)
        self.w_fc_pad = jnp.zeros((Hp, Cp), jnp.float32).at[:H, :num_classes].set(
            self.w_fc_raw.T)
        self.b_fc_pad = jnp.zeros((1, Cp), jnp.float32).at[0, :num_classes].set(
            self.b_fc_raw)

    def forward(self, x):
        """x: (batch, seq, input_size) float32 (batch_first=True, as in PyTorch)."""
        x = x.astype(jnp.float32)
        B, T, Din = x.shape
        B_pad = _round_up(B, 8)

        # (B,T,D) -> time-major (T,B,D), zero-padded to (T, B_pad, D_feat).
        # TODO(synk): fold this transpose/pad into the kernel-side DMA to avoid the
        # extra HBM copy of x for very long sequences.
        x_pad = jnp.pad(jnp.transpose(x, (1, 0, 2)),
                        ((0, 0), (0, B_pad - B), (0, self.D_feat - Din)))

        fwd = _get_forward_fn(self.num_layers, T, B_pad, self.D_feat,
                              self.hidden_size, self.H_pad, self.G_pad, self.C_pad)
        out_pad = fwd(x_pad, self.w_ih_stack, self.w_hh_stack, self.b_stack,
                      self.w_fc_pad, self.b_fc_pad)            # (L, B_pad, C_pad)

        # h_out.view(-1, H) is layer-major; fc + identity activation already applied.
        return out_pad[:, :B, :self.num_classes].reshape(
            self.num_layers * B, self.num_classes)


# ----------------------------------------------------------------------------
# Pure-JAX reference (unpadded, PyTorch semantics) for sanity check
# ----------------------------------------------------------------------------
def _reference_forward(model, x):
    H = model.hidden_size
    x_seq = jnp.transpose(x.astype(jnp.float32), (1, 0, 2))   # (T, B, D)
    layer_in = x_seq
    h_lasts = []
    for (w_ih, w_hh, b_ih, b_hh) in model.raw_params:
        B = layer_in.shape[1]
        h = jnp.zeros((B, H), jnp.float32)
        c = jnp.zeros((B, H), jnp.float32)
        outs = []
        for t in range(layer_in.shape[0]):
            gates = layer_in[t] @ w_ih.T + h @ w_hh.T + (b_ih + b_hh)
            i_g = jax.nn.sigmoid(gates[:, 0 * H:1 * H])
            f_g = jax.nn.sigmoid(gates[:, 1 * H:2 * H])
            g_g = jnp.tanh(gates[:, 2 * H:3 * H])
            o_g = jax.nn.sigmoid(gates[:, 3 * H:4 * H])
            c = f_g * c + i_g * g_g
            h = o_g * jnp.tanh(c)
            outs.append(h)
        layer_in = jnp.stack(outs, axis=0)
        h_lasts.append(h)
    h_flat = jnp.concatenate(h_lasts, axis=0)
    return h_flat @ model.w_fc_raw.T + model.b_fc_raw[None, :]


# ----------------------------------------------------------------------------
# Main
# ----------------------------------------------------------------------------
if __name__ == "__main__":
    key = jax.random.PRNGKey(0)
    k_x, k_model = jax.random.split(key)

    batch, seq, input_size = 2, 8, 4
    hidden_size, num_layers, num_classes = 32, 2, 3

    x = jax.random.normal(k_x, (batch, seq, input_size), dtype=jnp.float32)

    model = MultiLayerLSTMPallas(num_classes=num_classes,
                                 input_size=input_size,
                                 hidden_size=hidden_size,
                                 num_layers=num_layers,
                                 key=k_model)

    out = model.forward(x)
    out = jax.block_until_ready(out)

    ref = _reference_forward(model, x)
    assert out.shape == (num_layers * batch, num_classes), out.shape
    assert jnp.allclose(out, ref, atol=2e-4, rtol=2e-4), \
        f"max abs err {jnp.max(jnp.abs(out - ref))}"

    print("KERNEL_OK")
</pallas_src>

<mosaic_0001>
module attributes {stable_mosaic.version = 11 : i64} {
  func.func @kernel(%arg0: i32, %arg1: memref<8x8x128xf32, #tpu.memory_space<any>>, %arg2: memref<1x128x128xf32, #tpu.memory_space<vmem>>, %arg3: memref<1x128x128xf32, #tpu.memory_space<vmem>>, %arg4: memref<1x1x128xf32, #tpu.memory_space<vmem>>, %arg5: memref<128x128xf32, #tpu.memory_space<vmem>>, %arg6: memref<1x128xf32, #tpu.memory_space<vmem>>, %arg7: memref<1x8x128xf32, #tpu.memory_space<vmem>>, %arg8: memref<8x8x128xf32, #tpu.memory_space<vmem>>, %arg9: memref<8x8x128xf32, #tpu.memory_space<vmem>>, %arg10: memref<8x128xf32, #tpu.memory_space<vmem>>, %arg11: memref<8x128xf32, #tpu.memory_space<vmem>>) attributes {dimension_semantics = [#tpu.dimension_semantics<arbitrary>], iteration_bounds = array<i64: 2>, scalar_prefetch = 0 : i64, scratch_operands = 4 : i64, tpu.core_type = #tpu.core_type<tc>, window_params = [{}, {transform_indices = @transform_1, window_bounds = array<i64: 1, 128, 128>}, {transform_indices = @transform_2, window_bounds = array<i64: 1, 128, 128>}, {transform_indices = @transform_3, window_bounds = array<i64: 1, 1, 128>}, {pipeline_mode = #tpu.pipeline_mode<synchronous>, transform_indices = @transform_4, window_bounds = array<i64: 128, 128>}, {pipeline_mode = #tpu.pipeline_mode<synchronous>, transform_indices = @transform_5, window_bounds = array<i64: 1, 128>}, {transform_indices = @transform_6, window_bounds = array<i64: 1, 8, 128>}]} {
    %c0_i32 = arith.constant 0 : i32
    %0 = arith.cmpi eq, %arg0, %c0_i32 : i32
    %1 = arith.extui %0 : i1 to i32
    %c0_i32_0 = arith.constant 0 : i32
    %2 = arith.cmpi ne, %1, %c0_i32_0 : i32
    scf.if %2 {
      "tpu.region"() ({
        %321 = tpu.sem_alloc : memref<!tpu.dma_semaphore, #tpu.memory_space<semaphore_mem>>
        tpu.enqueue_dma source(%arg1 : memref<8x8x128xf32, #tpu.memory_space<any>>) target(%arg8 : memref<8x8x128xf32, #tpu.memory_space<vmem>>) target_semaphore(%321 : memref<!tpu.dma_semaphore, #tpu.memory_space<semaphore_mem>>)
        tpu.wait_dma2 semaphore(%321 : memref<!tpu.dma_semaphore, #tpu.memory_space<semaphore_mem>>) src(%arg1 : memref<8x8x128xf32, #tpu.memory_space<any>>) dst(%arg8 : memref<8x8x128xf32, #tpu.memory_space<vmem>>)
        tpu.yield
      }) : () -> ()
    } else {
    }
    %c0 = arith.constant 0 : index
    %c0_1 = arith.constant 0 : index
    %c0_2 = arith.constant 0 : index
    %3 = vector.load %arg4[%c0, %c0_1, %c0_2] : memref<1x1x128xf32, #tpu.memory_space<vmem>>, vector<1x1x128xf32>
    %4 = vector.shape_cast %3 : vector<1x1x128xf32> to vector<1x128xf32>
    %c0_3 = arith.constant 0 : index
    %c0_4 = arith.constant 0 : index
    %c0_5 = arith.constant 0 : index
    %5 = vector.load %arg8[%c0_3, %c0_4, %c0_5] : memref<8x8x128xf32, #tpu.memory_space<vmem>>, vector<8x8x128xf32>
    %6 = vector.shape_cast %5 : vector<8x8x128xf32> to vector<64x128xf32>
    %c0_6 = arith.constant 0 : index
    %c0_7 = arith.constant 0 : index
    %c0_8 = arith.constant 0 : index
    %7 = vector.load %arg2[%c0_6, %c0_7, %c0_8] : memref<1x128x128xf32, #tpu.memory_space<vmem>>, vector<1x128x128xf32>
    %8 = vector.shape_cast %7 : vector<1x128x128xf32> to vector<128x128xf32>
    %cst = arith.constant dense<0.000000e+00> : vector<64x128xf32>
    %9 = tpu.matmul %6, %8, %cst {dimension_numbers = #tpu.dot_dimension_numbers<[1], [0], [0], [1], [0, 0, 1, 1], [], []>} : vector<64x128xf32>, vector<128x128xf32>, vector<64x128xf32> -> vector<64x128xf32>
    %10 = vector.broadcast %4 : vector<1x128xf32> to vector<64x128xf32>
    %11 = arith.addf %9, %10 : vector<64x128xf32>
    %12 = vector.shape_cast %11 : vector<64x128xf32> to vector<8x8x128xf32>
    %c0_9 = arith.constant 0 : index
    %c0_10 = arith.constant 0 : index
    %c0_11 = arith.constant 0 : index
    %13 = vector.load %arg9[%c0_9, %c0_10, %c0_11] : memref<8x8x128xf32, #tpu.memory_space<vmem>>, vector<8x8x128xf32>
    tpu.vector_store %arg9[%c0_9, %c0_10, %c0_11], %12 {strides = array<i32>} : memref<8x8x128xf32, #tpu.memory_space<vmem>>, vector<8x8x128xf32>,
    %cst_12 = arith.constant 0.000000e+00 : f32
    %14 = vector.broadcast %cst_12 : f32 to vector<8x128xf32>
    %c0_13 = arith.constant 0 : index
    %c0_14 = arith.constant 0 : index
    %15 = vector.load %arg10[%c0_13, %c0_14] : memref<8x128xf32, #tpu.memory_space<vmem>>, vector<8x128xf32>
    tpu.vector_store %arg10[%c0_13, %c0_14], %14 {strides = array<i32>} : memref<8x128xf32, #tpu.memory_space<vmem>>, vector<8x128xf32>,
    %cst_15 = arith.constant 0.000000e+00 : f32
    %16 = vector.broadcast %cst_15 : f32 to vector<8x128xf32>
    %c0_16 = arith.constant 0 : index
    %c0_17 = arith.constant 0 : index
    %17 = vector.load %arg11[%c0_16, %c0_17] : memref<8x128xf32, #tpu.memory_space<vmem>>, vector<8x128xf32>
    tpu.vector_store %arg11[%c0_16, %c0_17], %16 {strides = array<i32>} : memref<8x128xf32, #tpu.memory_space<vmem>>, vector<8x128xf32>,
    %18 = tpu.iota {dimensions = array<i32: 1>} : vector<8x128xi32>
    %c64_i32 = arith.constant 64 : i32
    %19 = vector.broadcast %c64_i32 : i32 to vector<8x128xi32>
    %20 = arith.cmpi sge, %18, %19 : vector<8x128xi32>
    %c96_i32 = arith.constant 96 : i32
    %21 = vector.broadcast %c96_i32 : i32 to vector<8x128xi32>
    %22 = arith.cmpi slt, %18, %21 : vector<8x128xi32>
    %23 = arith.andi %20, %22 : vector<8x128xi1>
    %c0_i32_18 = arith.constant 0 : i32
    %24 = arith.index_cast %c0_i32_18 : i32 to index
    %c0_19 = arith.constant 0 : index
    %c0_20 = arith.constant 0 : index
    %25 = vector.load %arg9[%24, %c0_19, %c0_20] : memref<8x8x128xf32, #tpu.memory_space<vmem>>, vector<1x8x128xf32>
    %26 = vector.shape_cast %25 : vector<1x8x128xf32> to vector<8x128xf32>
    %c0_21 = arith.constant 0 : index
    %c0_22 = arith.constant 0 : index
    %27 = vector.load %arg10[%c0_21, %c0_22] : memref<8x128xf32, #tpu.memory_space<vmem>>, vector<8x128xf32>
    %c0_23 = arith.constant 0 : index
    %c0_24 = arith.constant 0 : index
    %c0_25 = arith.constant 0 : index
    %28 = vector.load %arg3[%c0_23, %c0_24, %c0_25] : memref<1x128x128xf32, #tpu.memory_space<vmem>>, vector<1x128x128xf32>
    %29 = vector.shape_cast %28 : vector<1x128x128xf32> to vector<128x128xf32>
    %cst_26 = arith.constant dense<0.000000e+00> : vector<8x128xf32>
    %30 = tpu.matmul %27, %29, %cst_26 {dimension_numbers = #tpu.dot_dimension_numbers<[1], [0], [0], [1], [0, 0, 1, 1], [], []>} : vector<8x128xf32>, vector<128x128xf32>, vector<8x128xf32> -> vector<8x128xf32>
    %31 = arith.addf %26, %30 : vector<8x128xf32>
    %cst_27 = arith.constant 2.000000e+00 : f32
    %32 = vector.broadcast %cst_27 : f32 to vector<8x128xf32>
    %33 = arith.mulf %32, %31 : vector<8x128xf32>
    %34 = arith.select %23, %33, %31 : vector<8x128xi1>, vector<8x128xf32>
    %35 = arith.negf %34 : vector<8x128xf32>
    %36 = math.exp %35 : vector<8x128xf32>
    %cst_28 = arith.constant 1.000000e+00 : f32
    %37 = vector.broadcast %cst_28 : f32 to vector<8x128xf32>
    %38 = arith.addf %37, %36 : vector<8x128xf32>
    %39 = arith.divf %37, %38 : vector<8x128xf32>
    %cst_29 = arith.constant 2.000000e+00 : f32
    %40 = vector.broadcast %cst_29 : f32 to vector<8x128xf32>
    %41 = arith.mulf %40, %39 : vector<8x128xf32>
    %cst_30 = arith.constant 1.000000e+00 : f32
    %42 = vector.broadcast %cst_30 : f32 to vector<8x128xf32>
    %43 = arith.subf %41, %42 : vector<8x128xf32>
    %44 = arith.select %23, %43, %39 : vector<8x128xi1>, vector<8x128xf32>
    %c96_i32_31 = arith.constant 96 : i32
    %45 = tpu.dynamic_rotate %44 by %c96_i32_31 dim 1 : vector<8x128xf32>, i32 -> vector<8x128xf32>
    %c64_i32_32 = arith.constant 64 : i32
    %46 = tpu.dynamic_rotate %44 by %c64_i32_32 dim 1 : vector<8x128xf32>, i32 -> vector<8x128xf32>
    %c32_i32 = arith.constant 32 : i32
    %47 = tpu.dynamic_rotate %44 by %c32_i32 dim 1 : vector<8x128xf32>, i32 -> vector<8x128xf32>
    %c0_33 = arith.constant 0 : index
    %c0_34 = arith.constant 0 : index
    %48 = vector.load %arg11[%c0_33, %c0_34] : memref<8x128xf32, #tpu.memory_space<vmem>>, vector<8x128xf32>
    %49 = arith.mulf %45, %48 : vector<8x128xf32>
    %50 = arith.mulf %44, %46 : vector<8x128xf32>
    %51 = arith.addf %49, %50 : vector<8x128xf32>
    %52 = math.tanh %51 : vector<8x128xf32>
    %53 = arith.mulf %47, %52 : vector<8x128xf32>
    %c0_35 = arith.constant 0 : index
    %c0_36 = arith.constant 0 : index
    %54 = vector.load %arg11[%c0_35, %c0_36] : memref<8x128xf32, #tpu.memory_space<vmem>>, vector<8x128xf32>
    tpu.vector_store %arg11[%c0_35, %c0_36], %51 {strides = array<i32>} : memref<8x128xf32, #tpu.memory_space<vmem>>, vector<8x128xf32>,
    %c0_37 = arith.constant 0 : index
    %c0_38 = arith.constant 0 : index
    %55 = vector.load %arg10[%c0_37, %c0_38] : memref<8x128xf32, #tpu.memory_space<vmem>>, vector<8x128xf32>
    tpu.vector_store %arg10[%c0_37, %c0_38], %53 {strides = array<i32>} : memref<8x128xf32, #tpu.memory_space<vmem>>, vector<8x128xf32>,
    %56 = arith.index_cast %c0_i32_18 : i32 to index
    %c0_39 = arith.constant 0 : index
    %c0_40 = arith.constant 0 : index
    %57 = vector.load %arg8[%56, %c0_39, %c0_40] : memref<8x8x128xf32, #tpu.memory_space<vmem>>, vector<1x8x128xf32>
    %58 = vector.shape_cast %57 : vector<1x8x128xf32> to vector<8x128xf32>
    %59 = vector.shape_cast %53 : vector<8x128xf32> to vector<1x8x128xf32>
    tpu.vector_store %arg8[%56, %c0_39, %c0_40], %59 {strides = array<i32>} : memref<8x8x128xf32, #tpu.memory_space<vmem>>, vector<1x8x128xf32>,
    %c1_i32 = arith.constant 1 : i32
    %60 = arith.index_cast %c1_i32 : i32 to index
    %c0_41 = arith.constant 0 : index
    %c0_42 = arith.constant 0 : index
    %61 = vector.load %arg9[%60, %c0_41, %c0_42] : memref<8x8x128xf32, #tpu.memory_space<vmem>>, vector<1x8x128xf32>
    %62 = vector.shape_cast %61 : vector<1x8x128xf32> to vector<8x128xf32>
    %c0_43 = arith.constant 0 : index
    %c0_44 = arith.constant 0 : index
    %63 = vector.load %arg10[%c0_43, %c0_44] : memref<8x128xf32, #tpu.memory_space<vmem>>, vector<8x128xf32>
    %c0_45 = arith.constant 0 : index
    %c0_46 = arith.constant 0 : index
    %c0_47 = arith.constant 0 : index
    %64 = vector.load %arg3[%c0_45, %c0_46, %c0_47] : memref<1x128x128xf32, #tpu.memory_space<vmem>>, vector<1x128x128xf32>
    %65 = vector.shape_cast %64 : vector<1x128x128xf32> to vector<128x128xf32>
    %cst_48 = arith.constant dense<0.000000e+00> : vector<8x128xf32>
    %66 = tpu.matmul %63, %65, %cst_48 {dimension_numbers = #tpu.dot_dimension_numbers<[1], [0], [0], [1], [0, 0, 1, 1], [], []>} : vector<8x128xf32>, vector<128x128xf32>, vector<8x128xf32> -> vector<8x128xf32>
    %67 = arith.addf %62, %66 : vector<8x128xf32>
    %cst_49 = arith.constant 2.000000e+00 : f32
    %68 = vector.broadcast %cst_49 : f32 to vector<8x128xf32>
    %69 = arith.mulf %68, %67 : vector<8x128xf32>
    %70 = arith.select %23, %69, %67 : vector<8x128xi1>, vector<8x128xf32>
    %71 = arith.negf %70 : vector<8x128xf32>
    %72 = math.exp %71 : vector<8x128xf32>
    %cst_50 = arith.constant 1.000000e+00 : f32
    %73 = vector.broadcast %cst_50 : f32 to vector<8x128xf32>
    %74 = arith.addf %73, %72 : vector<8x128xf32>
    %75 = arith.divf %73, %74 : vector<8x128xf32>
    %cst_51 = arith.constant 2.000000e+00 : f32
    %76 = vector.broadcast %cst_51 : f32 to vector<8x128xf32>
    %77 = arith.mulf %76, %75 : vector<8x128xf32>
    %cst_52 = arith.constant 1.000000e+00 : f32
    %78 = vector.broadcast %cst_52 : f32 to vector<8x128xf32>
    %79 = arith.subf %77, %78 : vector<8x128xf32>
    %80 = arith.select %23, %79, %75 : vector<8x128xi1>, vector<8x128xf32>
    %c96_i32_53 = arith.constant 96 : i32
    %81 = tpu.dynamic_rotate %80 by %c96_i32_53 dim 1 : vector<8x128xf32>, i32 -> vector<8x128xf32>
    %c64_i32_54 = arith.constant 64 : i32
    %82 = tpu.dynamic_rotate %80 by %c64_i32_54 dim 1 : vector<8x128xf32>, i32 -> vector<8x128xf32>
    %c32_i32_55 = arith.constant 32 : i32
    %83 = tpu.dynamic_rotate %80 by %c32_i32_55 dim 1 : vector<8x128xf32>, i32 -> vector<8x128xf32>
    %c0_56 = arith.constant 0 : index
    %c0_57 = arith.constant 0 : index
    %84 = vector.load %arg11[%c0_56, %c0_57] : memref<8x128xf32, #tpu.memory_space<vmem>>, vector<8x128xf32>
    %85 = arith.mulf %81, %84 : vector<8x128xf32>
    %86 = arith.mulf %80, %82 : vector<8x128xf32>
    %87 = arith.addf %85, %86 : vector<8x128xf32>
    %88 = math.tanh %87 : vector<8x128xf32>
    %89 = arith.mulf %83, %88 : vector<8x128xf32>
    %c0_58 = arith.constant 0 : index
    %c0_59 = arith.constant 0 : index
    %90 = vector.load %arg11[%c0_58, %c0_59] : memref<8x128xf32, #tpu.memory_space<vmem>>, vector<8x128xf32>
    tpu.vector_store %arg11[%c0_58, %c0_59], %87 {strides = array<i32>} : memref<8x128xf32, #tpu.memory_space<vmem>>, vector<8x128xf32>,
    %c0_60 = arith.constant 0 : index
    %c0_61 = arith.constant 0 : index
    %91 = vector.load %arg10[%c0_60, %c0_61] : memref<8x128xf32, #tpu.memory_space<vmem>>, vector<8x128xf32>
    tpu.vector_store %arg10[%c0_60, %c0_61], %89 {strides = array<i32>} : memref<8x128xf32, #tpu.memory_space<vmem>>, vector<8x128xf32>,
    %92 = arith.index_cast %c1_i32 : i32 to index
    %c0_62 = arith.constant 0 : index
    %c0_63 = arith.constant 0 : index
    %93 = vector.load %arg8[%92, %c0_62, %c0_63] : memref<8x8x128xf32, #tpu.memory_space<vmem>>, vector<1x8x128xf32>
    %94 = vector.shape_cast %93 : vector<1x8x128xf32> to vector<8x128xf32>
    %95 = vector.shape_cast %89 : vector<8x128xf32> to vector<1x8x128xf32>
    tpu.vector_store %arg8[%92, %c0_62, %c0_63], %95 {strides = array<i32>} : memref<8x8x128xf32, #tpu.memory_space<vmem>>, vector<1x8x128xf32>,
    %c2_i32 = arith.constant 2 : i32
    %96 = arith.index_cast %c2_i32 : i32 to index
    %c0_64 = arith.constant 0 : index
    %c0_65 = arith.constant 0 : index
    %97 = vector.load %arg9[%96, %c0_64, %c0_65] : memref<8x8x128xf32, #tpu.memory_space<vmem>>, vector<1x8x128xf32>
    %98 = vector.shape_cast %97 : vector<1x8x128xf32> to vector<8x128xf32>
    %c0_66 = arith.constant 0 : index
    %c0_67 = arith.constant 0 : index
    %99 = vector.load %arg10[%c0_66, %c0_67] : memref<8x128xf32, #tpu.memory_space<vmem>>, vector<8x128xf32>
    %c0_68 = arith.constant 0 : index
    %c0_69 = arith.constant 0 : index
    %c0_70 = arith.constant 0 : index
    %100 = vector.load %arg3[%c0_68, %c0_69, %c0_70] : memref<1x128x128xf32, #tpu.memory_space<vmem>>, vector<1x128x128xf32>
    %101 = vector.shape_cast %100 : vector<1x128x128xf32> to vector<128x128xf32>
    %cst_71 = arith.constant dense<0.000000e+00> : vector<8x128xf32>
    %102 = tpu.matmul %99, %101, %cst_71 {dimension_numbers = #tpu.dot_dimension_numbers<[1], [0], [0], [1], [0, 0, 1, 1], [], []>} : vector<8x128xf32>, vector<128x128xf32>, vector<8x128xf32> -> vector<8x128xf32>
    %103 = arith.addf %98, %102 : vector<8x128xf32>
    %cst_72 = arith.constant 2.000000e+00 : f32
    %104 = vector.broadcast %cst_72 : f32 to vector<8x128xf32>
    %105 = arith.mulf %104, %103 : vector<8x128xf32>
    %106 = arith.select %23, %105, %103 : vector<8x128xi1>, vector<8x128xf32>
    %107 = arith.negf %106 : vector<8x128xf32>
    %108 = math.exp %107 : vector<8x128xf32>
    %cst_73 = arith.constant 1.000000e+00 : f32
    %109 = vector.broadcast %cst_73 : f32 to vector<8x128xf32>
    %110 = arith.addf %109, %108 : vector<8x128xf32>
    %111 = arith.divf %109, %110 : vector<8x128xf32>
    %cst_74 = arith.constant 2.000000e+00 : f32
    %112 = vector.broadcast %cst_74 : f32 to vector<8x128xf32>
    %113 = arith.mulf %112, %111 : vector<8x128xf32>
    %cst_75 = arith.constant 1.000000e+00 : f32
    %114 = vector.broadcast %cst_75 : f32 to vector<8x128xf32>
    %115 = arith.subf %113, %114 : vector<8x128xf32>
    %116 = arith.select %23, %115, %111 : vector<8x128xi1>, vector<8x128xf32>
    %c96_i32_76 = arith.constant 96 : i32
    %117 = tpu.dynamic_rotate %116 by %c96_i32_76 dim 1 : vector<8x128xf32>, i32 -> vector<8x128xf32>
    %c64_i32_77 = arith.constant 64 : i32
    %118 = tpu.dynamic_rotate %116 by %c64_i32_77 dim 1 : vector<8x128xf32>, i32 -> vector<8x128xf32>
    %c32_i32_78 = arith.constant 32 : i32
    %119 = tpu.dynamic_rotate %116 by %c32_i32_78 dim 1 : vector<8x128xf32>, i32 -> vector<8x128xf32>
    %c0_79 = arith.constant 0 : index
    %c0_80 = arith.constant 0 : index
    %120 = vector.load %arg11[%c0_79, %c0_80] : memref<8x128xf32, #tpu.memory_space<vmem>>, vector<8x128xf32>
    %121 = arith.mulf %117, %120 : vector<8x128xf32>
    %122 = arith.mulf %116, %118 : vector<8x128xf32>
    %123 = arith.addf %121, %122 : vector<8x128xf32>
    %124 = math.tanh %123 : vector<8x128xf32>
    %125 = arith.mulf %119, %124 : vector<8x128xf32>
    %c0_81 = arith.constant 0 : index
    %c0_82 = arith.constant 0 : index
    %126 = vector.load %arg11[%c0_81, %c0_82] : memref<8x128xf32, #tpu.memory_space<vmem>>, vector<8x128xf32>
    tpu.vector_store %arg11[%c0_81, %c0_82], %123 {strides = array<i32>} : memref<8x128xf32, #tpu.memory_space<vmem>>, vector<8x128xf32>,
    %c0_83 = arith.constant 0 : index
    %c0_84 = arith.constant 0 : index
    %127 = vector.load %arg10[%c0_83, %c0_84] : memref<8x128xf32, #tpu.memory_space<vmem>>, vector<8x128xf32>
    tpu.vector_store %arg10[%c0_83, %c0_84], %125 {strides = array<i32>} : memref<8x128xf32, #tpu.memory_space<vmem>>, vector<8x128xf32>,
    %128 = arith.index_cast %c2_i32 : i32 to index
    %c0_85 = arith.constant 0 : index
    %c0_86 = arith.constant 0 : index
    %129 = vector.load %arg8[%128, %c0_85, %c0_86] : memref<8x8x128xf32, #tpu.memory_space<vmem>>, vector<1x8x128xf32>
    %130 = vector.shape_cast %129 : vector<1x8x128xf32> to vector<8x128xf32>
    %131 = vector.shape_cast %125 : vector<8x128xf32> to vector<1x8x128xf32>
    tpu.vector_store %arg8[%128, %c0_85, %c0_86], %131 {strides = array<i32>} : memref<8x8x128xf32, #tpu.memory_space<vmem>>, vector<1x8x128xf32>,
    %c3_i32 = arith.constant 3 : i32
    %132 = arith.index_cast %c3_i32 : i32 to index
    %c0_87 = arith.constant 0 : index
    %c0_88 = arith.constant 0 : index
    %133 = vector.load %arg9[%132, %c0_87, %c0_88] : memref<8x8x128xf32, #tpu.memory_space<vmem>>, vector<1x8x128xf32>
    %134 = vector.shape_cast %133 : vector<1x8x128xf32> to vector<8x128xf32>
    %c0_89 = arith.constant 0 : index
    %c0_90 = arith.constant 0 : index
    %135 = vector.load %arg10[%c0_89, %c0_90] : memref<8x128xf32, #tpu.memory_space<vmem>>, vector<8x128xf32>
    %c0_91 = arith.constant 0 : index
    %c0_92 = arith.constant 0 : index
    %c0_93 = arith.constant 0 : index
    %136 = vector.load %arg3[%c0_91, %c0_92, %c0_93] : memref<1x128x128xf32, #tpu.memory_space<vmem>>, vector<1x128x128xf32>
    %137 = vector.shape_cast %136 : vector<1x128x128xf32> to vector<128x128xf32>
    %cst_94 = arith.constant dense<0.000000e+00> : vector<8x128xf32>
    %138 = tpu.matmul %135, %137, %cst_94 {dimension_numbers = #tpu.dot_dimension_numbers<[1], [0], [0], [1], [0, 0, 1, 1], [], []>} : vector<8x128xf32>, vector<128x128xf32>, vector<8x128xf32> -> vector<8x128xf32>
    %139 = arith.addf %134, %138 : vector<8x128xf32>
    %cst_95 = arith.constant 2.000000e+00 : f32
    %140 = vector.broadcast %cst_95 : f32 to vector<8x128xf32>
    %141 = arith.mulf %140, %139 : vector<8x128xf32>
    %142 = arith.select %23, %141, %139 : vector<8x128xi1>, vector<8x128xf32>
    %143 = arith.negf %142 : vector<8x128xf32>
    %144 = math.exp %143 : vector<8x128xf32>
    %cst_96 = arith.constant 1.000000e+00 : f32
    %145 = vector.broadcast %cst_96 : f32 to vector<8x128xf32>
    %146 = arith.addf %145, %144 : vector<8x128xf32>
    %147 = arith.divf %145, %146 : vector<8x128xf32>
    %cst_97 = arith.constant 2.000000e+00 : f32
    %148 = vector.broadcast %cst_97 : f32 to vector<8x128xf32>
    %149 = arith.mulf %148, %147 : vector<8x128xf32>
    %cst_98 = arith.constant 1.000000e+00 : f32
    %150 = vector.broadcast %cst_98 : f32 to vector<8x128xf32>
    %151 = arith.subf %149, %150 : vector<8x128xf32>
    %152 = arith.select %23, %151, %147 : vector<8x128xi1>, vector<8x128xf32>
    %c96_i32_99 = arith.constant 96 : i32
    %153 = tpu.dynamic_rotate %152 by %c96_i32_99 dim 1 : vector<8x128xf32>, i32 -> vector<8x128xf32>
    %c64_i32_100 = arith.constant 64 : i32
    %154 = tpu.dynamic_rotate %152 by %c64_i32_100 dim 1 : vector<8x128xf32>, i32 -> vector<8x128xf32>
    %c32_i32_101 = arith.constant 32 : i32
    %155 = tpu.dynamic_rotate %152 by %c32_i32_101 dim 1 : vector<8x128xf32>, i32 -> vector<8x128xf32>
    %c0_102 = arith.constant 0 : index
    %c0_103 = arith.constant 0 : index
    %156 = vector.load %arg11[%c0_102, %c0_103] : memref<8x128xf32, #tpu.memory_space<vmem>>, vector<8x128xf32>
    %157 = arith.mulf %153, %156 : vector<8x128xf32>
    %158 = arith.mulf %152, %154 : vector<8x128xf32>
    %159 = arith.addf %157, %158 : vector<8x128xf32>
    %160 = math.tanh %159 : vector<8x128xf32>
    %161 = arith.mulf %155, %160 : vector<8x128xf32>
    %c0_104 = arith.constant 0 : index
    %c0_105 = arith.constant 0 : index
    %162 = vector.load %arg11[%c0_104, %c0_105] : memref<8x128xf32, #tpu.memory_space<vmem>>, vector<8x128xf32>
    tpu.vector_store %arg11[%c0_104, %c0_105], %159 {strides = array<i32>} : memref<8x128xf32, #tpu.memory_space<vmem>>, vector<8x128xf32>,
    %c0_106 = arith.constant 0 : index
    %c0_107 = arith.constant 0 : index
    %163 = vector.load %arg10[%c0_106, %c0_107] : memref<8x128xf32, #tpu.memory_space<vmem>>, vector<8x128xf32>
    tpu.vector_store %arg10[%c0_106, %c0_107], %161 {strides = array<i32>} : memref<8x128xf32, #tpu.memory_space<vmem>>, vector<8x128xf32>,
    %164 = arith.index_cast %c3_i32 : i32 to index
    %c0_108 = arith.constant 0 : index
    %c0_109 = arith.constant 0 : index
    %165 = vector.load %arg8[%164, %c0_108, %c0_109] : memref<8x8x128xf32, #tpu.memory_space<vmem>>, vector<1x8x128xf32>
    %166 = vector.shape_cast %165 : vector<1x8x128xf32> to vector<8x128xf32>
    %167 = vector.shape_cast %161 : vector<8x128xf32> to vector<1x8x128xf32>
    tpu.vector_store %arg8[%164, %c0_108, %c0_109], %167 {strides = array<i32>} : memref<8x8x128xf32, #tpu.memory_space<vmem>>, vector<1x8x128xf32>,
    %c4_i32 = arith.constant 4 : i32
    %168 = arith.index_cast %c4_i32 : i32 to index
    %c0_110 = arith.constant 0 : index
    %c0_111 = arith.constant 0 : index
    %169 = vector.load %arg9[%168, %c0_110, %c0_111] : memref<8x8x128xf32, #tpu.memory_space<vmem>>, vector<1x8x128xf32>
    %170 = vector.shape_cast %169 : vector<1x8x128xf32> to vector<8x128xf32>
    %c0_112 = arith.constant 0 : index
    %c0_113 = arith.constant 0 : index
    %171 = vector.load %arg10[%c0_112, %c0_113] : memref<8x128xf32, #tpu.memory_space<vmem>>, vector<8x128xf32>
    %c0_114 = arith.constant 0 : index
    %c0_115 = arith.constant 0 : index
    %c0_116 = arith.constant 0 : index
    %172 = vector.load %arg3[%c0_114, %c0_115, %c0_116] : memref<1x128x128xf32, #tpu.memory_space<vmem>>, vector<1x128x128xf32>
    %173 = vector.shape_cast %172 : vector<1x128x128xf32> to vector<128x128xf32>
    %cst_117 = arith.constant dense<0.000000e+00> : vector<8x128xf32>
    %174 = tpu.matmul %171, %173, %cst_117 {dimension_numbers = #tpu.dot_dimension_numbers<[1], [0], [0], [1], [0, 0, 1, 1], [], []>} : vector<8x128xf32>, vector<128x128xf32>, vector<8x128xf32> -> vector<8x128xf32>
    %175 = arith.addf %170, %174 : vector<8x128xf32>
    %cst_118 = arith.constant 2.000000e+00 : f32
    %176 = vector.broadcast %cst_118 : f32 to vector<8x128xf32>
    %177 = arith.mulf %176, %175 : vector<8x128xf32>
    %178 = arith.select %23, %177, %175 : vector<8x128xi1>, vector<8x128xf32>
    %179 = arith.negf %178 : vector<8x128xf32>
    %180 = math.exp %179 : vector<8x128xf32>
    %cst_119 = arith.constant 1.000000e+00 : f32
    %181 = vector.broadcast %cst_119 : f32 to vector<8x128xf32>
    %182 = arith.addf %181, %180 : vector<8x128xf32>
    %183 = arith.divf %181, %182 : vector<8x128xf32>
    %cst_120 = arith.constant 2.000000e+00 : f32
    %184 = vector.broadcast %cst_120 : f32 to vector<8x128xf32>
    %185 = arith.mulf %184, %183 : vector<8x128xf32>
    %cst_121 = arith.constant 1.000000e+00 : f32
    %186 = vector.broadcast %cst_121 : f32 to vector<8x128xf32>
    %187 = arith.subf %185, %186 : vector<8x128xf32>
    %188 = arith.select %23, %187, %183 : vector<8x128xi1>, vector<8x128xf32>
    %c96_i32_122 = arith.constant 96 : i32
    %189 = tpu.dynamic_rotate %188 by %c96_i32_122 dim 1 : vector<8x128xf32>, i32 -> vector<8x128xf32>
    %c64_i32_123 = arith.constant 64 : i32
    %190 = tpu.dynamic_rotate %188 by %c64_i32_123 dim 1 : vector<8x128xf32>, i32 -> vector<8x128xf32>
    %c32_i32_124 = arith.constant 32 : i32
    %191 = tpu.dynamic_rotate %188 by %c32_i32_124 dim 1 : vector<8x128xf32>, i32 -> vector<8x128xf32>
    %c0_125 = arith.constant 0 : index
    %c0_126 = arith.constant 0 : index
    %192 = vector.load %arg11[%c0_125, %c0_126] : memref<8x128xf32, #tpu.memory_space<vmem>>, vector<8x128xf32>
    %193 = arith.mulf %189, %192 : vector<8x128xf32>
    %194 = arith.mulf %188, %190 : vector<8x128xf32>
    %195 = arith.addf %193, %194 : vector<8x128xf32>
    %196 = math.tanh %195 : vector<8x128xf32>
    %197 = arith.mulf %191, %196 : vector<8x128xf32>
    %c0_127 = arith.constant 0 : index
    %c0_128 = arith.constant 0 : index
    %198 = vector.load %arg11[%c0_127, %c0_128] : memref<8x128xf32, #tpu.memory_space<vmem>>, vector<8x128xf32>
    tpu.vector_store %arg11[%c0_127, %c0_128], %195 {strides = array<i32>} : memref<8x128xf32, #tpu.memory_space<vmem>>, vector<8x128xf32>,
    %c0_129 = arith.constant 0 : index
    %c0_130 = arith.constant 0 : index
    %199 = vector.load %arg10[%c0_129, %c0_130] : memref<8x128xf32, #tpu.memory_space<vmem>>, vector<8x128xf32>
    tpu.vector_store %arg10[%c0_129, %c0_130], %197 {strides = array<i32>} : memref<8x128xf32, #tpu.memory_space<vmem>>, vector<8x128xf32>,
    %200 = arith.index_cast %c4_i32 : i32 to index
    %c0_131 = arith.constant 0 : index
    %c0_132 = arith.constant 0 : index
    %201 = vector.load %arg8[%200, %c0_131, %c0_132] : memref<8x8x128xf32, #tpu.memory_space<vmem>>, vector<1x8x128xf32>
    %202 = vector.shape_cast %201 : vector<1x8x128xf32> to vector<8x128xf32>
    %203 = vector.shape_cast %197 : vector<8x128xf32> to vector<1x8x128xf32>
    tpu.vector_store %arg8[%200, %c0_131, %c0_132], %203 {strides = array<i32>} : memref<8x8x128xf32, #tpu.memory_space<vmem>>, vector<1x8x128xf32>,
    %c5_i32 = arith.constant 5 : i32
    %204 = arith.index_cast %c5_i32 : i32 to index
    %c0_133 = arith.constant 0 : index
    %c0_134 = arith.constant 0 : index
    %205 = vector.load %arg9[%204, %c0_133, %c0_134] : memref<8x8x128xf32, #tpu.memory_space<vmem>>, vector<1x8x128xf32>
    %206 = vector.shape_cast %205 : vector<1x8x128xf32> to vector<8x128xf32>
    %c0_135 = arith.constant 0 : index
    %c0_136 = arith.constant 0 : index
    %207 = vector.load %arg10[%c0_135, %c0_136] : memref<8x128xf32, #tpu.memory_space<vmem>>, vector<8x128xf32>
    %c0_137 = arith.constant 0 : index
    %c0_138 = arith.constant 0 : index
    %c0_139 = arith.constant 0 : index
    %208 = vector.load %arg3[%c0_137, %c0_138, %c0_139] : memref<1x128x128xf32, #tpu.memory_space<vmem>>, vector<1x128x128xf32>
    %209 = vector.shape_cast %208 : vector<1x128x128xf32> to vector<128x128xf32>
    %cst_140 = arith.constant dense<0.000000e+00> : vector<8x128xf32>
    %210 = tpu.matmul %207, %209, %cst_140 {dimension_numbers = #tpu.dot_dimension_numbers<[1], [0], [0], [1], [0, 0, 1, 1], [], []>} : vector<8x128xf32>, vector<128x128xf32>, vector<8x128xf32> -> vector<8x128xf32>
    %211 = arith.addf %206, %210 : vector<8x128xf32>
    %cst_141 = arith.constant 2.000000e+00 : f32
    %212 = vector.broadcast %cst_141 : f32 to vector<8x128xf32>
    %213 = arith.mulf %212, %211 : vector<8x128xf32>
    %214 = arith.select %23, %213, %211 : vector<8x128xi1>, vector<8x128xf32>
    %215 = arith.negf %214 : vector<8x128xf32>
    %216 = math.exp %215 : vector<8x128xf32>
    %cst_142 = arith.constant 1.000000e+00 : f32
    %217 = vector.broadcast %cst_142 : f32 to vector<8x128xf32>
    %218 = arith.addf %217, %216 : vector<8x128xf32>
    %219 = arith.divf %217, %218 : vector<8x128xf32>
    %cst_143 = arith.constant 2.000000e+00 : f32
    %220 = vector.broadcast %cst_143 : f32 to vector<8x128xf32>
    %221 = arith.mulf %220, %219 : vector<8x128xf32>
    %cst_144 = arith.constant 1.000000e+00 : f32
    %222 = vector.broadcast %cst_144 : f32 to vector<8x128xf32>
    %223 = arith.subf %221, %222 : vector<8x128xf32>
    %224 = arith.select %23, %223, %219 : vector<8x128xi1>, vector<8x128xf32>
    %c96_i32_145 = arith.constant 96 : i32
    %225 = tpu.dynamic_rotate %224 by %c96_i32_145 dim 1 : vector<8x128xf32>, i32 -> vector<8x128xf32>
    %c64_i32_146 = arith.constant 64 : i32
    %226 = tpu.dynamic_rotate %224 by %c64_i32_146 dim 1 : vector<8x128xf32>, i32 -> vector<8x128xf32>
    %c32_i32_147 = arith.constant 32 : i32
    %227 = tpu.dynamic_rotate %224 by %c32_i32_147 dim 1 : vector<8x128xf32>, i32 -> vector<8x128xf32>
    %c0_148 = arith.constant 0 : index
    %c0_149 = arith.constant 0 : index
    %228 = vector.load %arg11[%c0_148, %c0_149] : memref<8x128xf32, #tpu.memory_space<vmem>>, vector<8x128xf32>
    %229 = arith.mulf %225, %228 : vector<8x128xf32>
    %230 = arith.mulf %224, %226 : vector<8x128xf32>
    %231 = arith.addf %229, %230 : vector<8x128xf32>
    %232 = math.tanh %231 : vector<8x128xf32>
    %233 = arith.mulf %227, %232 : vector<8x128xf32>
    %c0_150 = arith.constant 0 : index
    %c0_151 = arith.constant 0 : index
    %234 = vector.load %arg11[%c0_150, %c0_151] : memref<8x128xf32, #tpu.memory_space<vmem>>, vector<8x128xf32>
    tpu.vector_store %arg11[%c0_150, %c0_151], %231 {strides = array<i32>} : memref<8x128xf32, #tpu.memory_space<vmem>>, vector<8x128xf32>,
    %c0_152 = arith.constant 0 : index
    %c0_153 = arith.constant 0 : index
    %235 = vector.load %arg10[%c0_152, %c0_153] : memref<8x128xf32, #tpu.memory_space<vmem>>, vector<8x128xf32>
    tpu.vector_store %arg10[%c0_152, %c0_153], %233 {strides = array<i32>} : memref<8x128xf32, #tpu.memory_space<vmem>>, vector<8x128xf32>,
    %236 = arith.index_cast %c5_i32 : i32 to index
    %c0_154 = arith.constant 0 : index
    %c0_155 = arith.constant 0 : index
    %237 = vector.load %arg8[%236, %c0_154, %c0_155] : memref<8x8x128xf32, #tpu.memory_space<vmem>>, vector<1x8x128xf32>
    %238 = vector.shape_cast %237 : vector<1x8x128xf32> to vector<8x128xf32>
    %239 = vector.shape_cast %233 : vector<8x128xf32> to vector<1x8x128xf32>
    tpu.vector_store %arg8[%236, %c0_154, %c0_155], %239 {strides = array<i32>} : memref<8x8x128xf32, #tpu.memory_space<vmem>>, vector<1x8x128xf32>,
    %c6_i32 = arith.constant 6 : i32
    %240 = arith.index_cast %c6_i32 : i32 to index
    %c0_156 = arith.constant 0 : index
    %c0_157 = arith.constant 0 : index
    %241 = vector.load %arg9[%240, %c0_156, %c0_157] : memref<8x8x128xf32, #tpu.memory_space<vmem>>, vector<1x8x128xf32>
    %242 = vector.shape_cast %241 : vector<1x8x128xf32> to vector<8x128xf32>
    %c0_158 = arith.constant 0 : index
    %c0_159 = arith.constant 0 : index
    %243 = vector.load %arg10[%c0_158, %c0_159] : memref<8x128xf32, #tpu.memory_space<vmem>>, vector<8x128xf32>
    %c0_160 = arith.constant 0 : index
    %c0_161 = arith.constant 0 : index
    %c0_162 = arith.constant 0 : index
    %244 = vector.load %arg3[%c0_160, %c0_161, %c0_162] : memref<1x128x128xf32, #tpu.memory_space<vmem>>, vector<1x128x128xf32>
    %245 = vector.shape_cast %244 : vector<1x128x128xf32> to vector<128x128xf32>
    %cst_163 = arith.constant dense<0.000000e+00> : vector<8x128xf32>
    %246 = tpu.matmul %243, %245, %cst_163 {dimension_numbers = #tpu.dot_dimension_numbers<[1], [0], [0], [1], [0, 0, 1, 1], [], []>} : vector<8x128xf32>, vector<128x128xf32>, vector<8x128xf32> -> vector<8x128xf32>
    %247 = arith.addf %242, %246 : vector<8x128xf32>
    %cst_164 = arith.constant 2.000000e+00 : f32
    %248 = vector.broadcast %cst_164 : f32 to vector<8x128xf32>
    %249 = arith.mulf %248, %247 : vector<8x128xf32>
    %250 = arith.select %23, %249, %247 : vector<8x128xi1>, vector<8x128xf32>
    %251 = arith.negf %250 : vector<8x128xf32>
    %252 = math.exp %251 : vector<8x128xf32>
    %cst_165 = arith.constant 1.000000e+00 : f32
    %253 = vector.broadcast %cst_165 : f32 to vector<8x128xf32>
    %254 = arith.addf %253, %252 : vector<8x128xf32>
    %255 = arith.divf %253, %254 : vector<8x128xf32>
    %cst_166 = arith.constant 2.000000e+00 : f32
    %256 = vector.broadcast %cst_166 : f32 to vector<8x128xf32>
    %257 = arith.mulf %256, %255 : vector<8x128xf32>
    %cst_167 = arith.constant 1.000000e+00 : f32
    %258 = vector.broadcast %cst_167 : f32 to vector<8x128xf32>
    %259 = arith.subf %257, %258 : vector<8x128xf32>
    %260 = arith.select %23, %259, %255 : vector<8x128xi1>, vector<8x128xf32>
    %c96_i32_168 = arith.constant 96 : i32
    %261 = tpu.dynamic_rotate %260 by %c96_i32_168 dim 1 : vector<8x128xf32>, i32 -> vector<8x128xf32>
    %c64_i32_169 = arith.constant 64 : i32
    %262 = tpu.dynamic_rotate %260 by %c64_i32_169 dim 1 : vector<8x128xf32>, i32 -> vector<8x128xf32>
    %c32_i32_170 = arith.constant 32 : i32
    %263 = tpu.dynamic_rotate %260 by %c32_i32_170 dim 1 : vector<8x128xf32>, i32 -> vector<8x128xf32>
    %c0_171 = arith.constant 0 : index
    %c0_172 = arith.constant 0 : index
    %264 = vector.load %arg11[%c0_171, %c0_172] : memref<8x128xf32, #tpu.memory_space<vmem>>, vector<8x128xf32>
    %265 = arith.mulf %261, %264 : vector<8x128xf32>
    %266 = arith.mulf %260, %262 : vector<8x128xf32>
    %267 = arith.addf %265, %266 : vector<8x128xf32>
    %268 = math.tanh %267 : vector<8x128xf32>
    %269 = arith.mulf %263, %268 : vector<8x128xf32>
    %c0_173 = arith.constant 0 : index
    %c0_174 = arith.constant 0 : index
    %270 = vector.load %arg11[%c0_173, %c0_174] : memref<8x128xf32, #tpu.memory_space<vmem>>, vector<8x128xf32>
    tpu.vector_store %arg11[%c0_173, %c0_174], %267 {strides = array<i32>} : memref<8x128xf32, #tpu.memory_space<vmem>>, vector<8x128xf32>,
    %c0_175 = arith.constant 0 : index
    %c0_176 = arith.constant 0 : index
    %271 = vector.load %arg10[%c0_175, %c0_176] : memref<8x128xf32, #tpu.memory_space<vmem>>, vector<8x128xf32>
    tpu.vector_store %arg10[%c0_175, %c0_176], %269 {strides = array<i32>} : memref<8x128xf32, #tpu.memory_space<vmem>>, vector<8x128xf32>,
    %272 = arith.index_cast %c6_i32 : i32 to index
    %c0_177 = arith.constant 0 : index
    %c0_178 = arith.constant 0 : index
    %273 = vector.load %arg8[%272, %c0_177, %c0_178] : memref<8x8x128xf32, #tpu.memory_space<vmem>>, vector<1x8x128xf32>
    %274 = vector.shape_cast %273 : vector<1x8x128xf32> to vector<8x128xf32>
    %275 = vector.shape_cast %269 : vector<8x128xf32> to vector<1x8x128xf32>
    tpu.vector_store %arg8[%272, %c0_177, %c0_178], %275 {strides = array<i32>} : memref<8x8x128xf32, #tpu.memory_space<vmem>>, vector<1x8x128xf32>,
    %c7_i32 = arith.constant 7 : i32
    %276 = arith.index_cast %c7_i32 : i32 to index
    %c0_179 = arith.constant 0 : index
    %c0_180 = arith.constant 0 : index
    %277 = vector.load %arg9[%276, %c0_179, %c0_180] : memref<8x8x128xf32, #tpu.memory_space<vmem>>, vector<1x8x128xf32>
    %278 = vector.shape_cast %277 : vector<1x8x128xf32> to vector<8x128xf32>
    %c0_181 = arith.constant 0 : index
    %c0_182 = arith.constant 0 : index
    %279 = vector.load %arg10[%c0_181, %c0_182] : memref<8x128xf32, #tpu.memory_space<vmem>>, vector<8x128xf32>
    %c0_183 = arith.constant 0 : index
    %c0_184 = arith.constant 0 : index
    %c0_185 = arith.constant 0 : index
    %280 = vector.load %arg3[%c0_183, %c0_184, %c0_185] : memref<1x128x128xf32, #tpu.memory_space<vmem>>, vector<1x128x128xf32>
    %281 = vector.shape_cast %280 : vector<1x128x128xf32> to vector<128x128xf32>
    %cst_186 = arith.constant dense<0.000000e+00> : vector<8x128xf32>
    %282 = tpu.matmul %279, %281, %cst_186 {dimension_numbers = #tpu.dot_dimension_numbers<[1], [0], [0], [1], [0, 0, 1, 1], [], []>} : vector<8x128xf32>, vector<128x128xf32>, vector<8x128xf32> -> vector<8x128xf32>
    %283 = arith.addf %278, %282 : vector<8x128xf32>
    %cst_187 = arith.constant 2.000000e+00 : f32
    %284 = vector.broadcast %cst_187 : f32 to vector<8x128xf32>
    %285 = arith.mulf %284, %283 : vector<8x128xf32>
    %286 = arith.select %23, %285, %283 : vector<8x128xi1>, vector<8x128xf32>
    %287 = arith.negf %286 : vector<8x128xf32>
    %288 = math.exp %287 : vector<8x128xf32>
    %cst_188 = arith.constant 1.000000e+00 : f32
    %289 = vector.broadcast %cst_188 : f32 to vector<8x128xf32>
    %290 = arith.addf %289, %288 : vector<8x128xf32>
    %291 = arith.divf %289, %290 : vector<8x128xf32>
    %cst_189 = arith.constant 2.000000e+00 : f32
    %292 = vector.broadcast %cst_189 : f32 to vector<8x128xf32>
    %293 = arith.mulf %292, %291 : vector<8x128xf32>
    %cst_190 = arith.constant 1.000000e+00 : f32
    %294 = vector.broadcast %cst_190 : f32 to vector<8x128xf32>
    %295 = arith.subf %293, %294 : vector<8x128xf32>
    %296 = arith.select %23, %295, %291 : vector<8x128xi1>, vector<8x128xf32>
    %c96_i32_191 = arith.constant 96 : i32
    %297 = tpu.dynamic_rotate %296 by %c96_i32_191 dim 1 : vector<8x128xf32>, i32 -> vector<8x128xf32>
    %c64_i32_192 = arith.constant 64 : i32
    %298 = tpu.dynamic_rotate %296 by %c64_i32_192 dim 1 : vector<8x128xf32>, i32 -> vector<8x128xf32>
    %c32_i32_193 = arith.constant 32 : i32
    %299 = tpu.dynamic_rotate %296 by %c32_i32_193 dim 1 : vector<8x128xf32>, i32 -> vector<8x128xf32>
    %c0_194 = arith.constant 0 : index
    %c0_195 = arith.constant 0 : index
    %300 = vector.load %arg11[%c0_194, %c0_195] : memref<8x128xf32, #tpu.memory_space<vmem>>, vector<8x128xf32>
    %301 = arith.mulf %297, %300 : vector<8x128xf32>
    %302 = arith.mulf %296, %298 : vector<8x128xf32>
    %303 = arith.addf %301, %302 : vector<8x128xf32>
    %304 = math.tanh %303 : vector<8x128xf32>
    %305 = arith.mulf %299, %304 : vector<8x128xf32>
    %c0_196 = arith.constant 0 : index
    %c0_197 = arith.constant 0 : index
    %306 = vector.load %arg11[%c0_196, %c0_197] : memref<8x128xf32, #tpu.memory_space<vmem>>, vector<8x128xf32>
    tpu.vector_store %arg11[%c0_196, %c0_197], %303 {strides = array<i32>} : memref<8x128xf32, #tpu.memory_space<vmem>>, vector<8x128xf32>,
    %c0_198 = arith.constant 0 : index
    %c0_199 = arith.constant 0 : index
    %307 = vector.load %arg10[%c0_198, %c0_199] : memref<8x128xf32, #tpu.memory_space<vmem>>, vector<8x128xf32>
    tpu.vector_store %arg10[%c0_198, %c0_199], %305 {strides = array<i32>} : memref<8x128xf32, #tpu.memory_space<vmem>>, vector<8x128xf32>,
    %308 = arith.index_cast %c7_i32 : i32 to index
    %c0_200 = arith.constant 0 : index
    %c0_201 = arith.constant 0 : index
    %309 = vector.load %arg8[%308, %c0_200, %c0_201] : memref<8x8x128xf32, #tpu.memory_space<vmem>>, vector<1x8x128xf32>
    %310 = vector.shape_cast %309 : vector<1x8x128xf32> to vector<8x128xf32>
    %311 = vector.shape_cast %305 : vector<8x128xf32> to vector<1x8x128xf32>
    tpu.vector_store %arg8[%308, %c0_200, %c0_201], %311 {strides = array<i32>} : memref<8x8x128xf32, #tpu.memory_space<vmem>>, vector<1x8x128xf32>,
    %c8_i32 = arith.constant 8 : i32
    %c0_202 = arith.constant 0 : index
    %c0_203 = arith.constant 0 : index
    %312 = vector.load %arg10[%c0_202, %c0_203] : memref<8x128xf32, #tpu.memory_space<vmem>>, vector<8x128xf32>
    %c0_204 = arith.constant 0 : index
    %c0_205 = arith.constant 0 : index
    %313 = vector.load %arg5[%c0_204, %c0_205] : memref<128x128xf32, #tpu.memory_space<vmem>>, vector<128x128xf32>
    %cst_206 = arith.constant dense<0.000000e+00> : vector<8x128xf32>
    %314 = tpu.matmul %312, %313, %cst_206 {dimension_numbers = #tpu.dot_dimension_numbers<[1], [0], [0], [1], [0, 0, 1, 1], [], []>} : vector<8x128xf32>, vector<128x128xf32>, vector<8x128xf32> -> vector<8x128xf32>
    %c0_207 = arith.constant 0 : index
    %c0_208 = arith.constant 0 : index
    %315 = vector.load %arg6[%c0_207, %c0_208] : memref<1x128xf32, #tpu.memory_space<vmem>>, vector<1x128xf32>
    %316 = vector.broadcast %315 : vector<1x128xf32> to vector<8x128xf32>
    %317 = arith.addf %314, %316 : vector<8x128xf32>
    %c0_209 = arith.constant 0 : index
    %c0_210 = arith.constant 0 : index
    %c0_211 = arith.constant 0 : index
    %318 = vector.load %arg7[%c0_209, %c0_210, %c0_211] : memref<1x8x128xf32, #tpu.memory_space<vmem>>, vector<1x8x128xf32>
    %319 = vector.shape_cast %318 : vector<1x8x128xf32> to vector<8x128xf32>
    %320 = vector.shape_cast %317 : vector<8x128xf32> to vector<1x8x128xf32>
    tpu.vector_store %arg7[%c0_209, %c0_210, %c0_211], %320 {strides = array<i32>} : memref<1x8x128xf32, #tpu.memory_space<vmem>>, vector<1x8x128xf32>,
    return
  }
  func.func @transform_1(%arg0: i32) -> (i32, i32, i32) {
    %c0_i32 = arith.constant 0 : i32
    %c0_i32_0 = arith.constant 0 : i32
    %c0_i32_1 = arith.constant 0 : i32
    return %arg0, %c0_i32, %c0_i32_0 : i32, i32, i32
  }
  func.func @transform_2(%arg0: i32) -> (i32, i32, i32) {
    %c0_i32 = arith.constant 0 : i32
    %c0_i32_0 = arith.constant 0 : i32
    %c0_i32_1 = arith.constant 0 : i32
    return %arg0, %c0_i32, %c0_i32_0 : i32, i32, i32
  }
  func.func @transform_3(%arg0: i32) -> (i32, i32, i32) {
    %c0_i32 = arith.constant 0 : i32
    %c0_i32_0 = arith.constant 0 : i32
    %c0_i32_1 = arith.constant 0 : i32
    return %arg0, %c0_i32, %c0_i32_0 : i32, i32, i32
  }
  func.func @transform_4(%arg0: i32) -> (i32, i32) {
    %c0_i32 = arith.constant 0 : i32
    %c0_i32_0 = arith.constant 0 : i32
    %c0_i32_1 = arith.constant 0 : i32
    return %c0_i32, %c0_i32_0 : i32, i32
  }
  func.func @transform_5(%arg0: i32) -> (i32, i32) {
    %c0_i32 = arith.constant 0 : i32
    %c0_i32_0 = arith.constant 0 : i32
    %c0_i32_1 = arith.constant 0 : i32
    return %c0_i32, %c0_i32_0 : i32, i32
  }
  func.func @transform_6(%arg0: i32) -> (i32, i32, i32) {
    %c0_i32 = arith.constant 0 : i32
    %c0_i32_0 = arith.constant 0 : i32
    %c0_i32_1 = arith.constant 0 : i32
    return %arg0, %c0_i32, %c0_i32_0 : i32, i32, i32
  }
}

</mosaic_0001>

<llo_original>
// kernel: tpu_custom_call.1
$region0: #{tpu_custom_call.1}
  #allocation0 [shape = 'u32[]', space=smem, size = 0x4, offset = 0x4, fixed_abs, tag = 'smem constant byte address 0x4 - core index']
  #allocation1 [shape = 'u32[144,128]{1,0:T(1,128)}', space=vmem, size = 0x12000, scoped, tag = 'internal scratch']
  #allocation2 [shape = 'f32[8,8,128]{2,1,0:T(8,128)}', space=vmem, size = 0x8000, scoped, tag = 'scratch operand']
  #allocation3 [shape = 'f32[8,8,128]{2,1,0:T(8,128)}', space=vmem, size = 0x8000, scoped, tag = 'scratch operand']
  #allocation4 [shape = 'f32[8,128]{1,0:T(8,128)}', space=vmem, size = 0x1000, scoped, tag = 'scratch operand']
  #allocation5 [shape = 'f32[8,128]{1,0:T(8,128)}', space=vmem, size = 0x1000, scoped, tag = 'scratch operand']
  #allocation14 [shape = 's32[]', space=sflag, size = 0x4, offset = 0, fixed_abs, tag = 'sflag constant byte address 0x0 - dummy sync flag']
  #allocation15 [shape = 's32[]', space=sflag, size = 0x4, offset = 0, fixed_abs, tag = 'sflag constant byte address 0x0 - dummy sync flag']
  #allocation16 [shape = 'u32[]', space=smem, size = 0x4, offset = 0x44, fixed_abs, tag = 'smem constant byte address 0x44 - assertion arg 0']
  #allocation17 [shape = 'u32[]', space=smem, size = 0x4, offset = 0x48, fixed_abs, tag = 'smem constant byte address 0x48 - assertion arg 1']
  %s0 = inlined_call_operand.hbm [shape: f32[8,8,128], index: 0, kind: input, shape index: {}]
  %s1 = inlined_call_operand.hbm [shape: f32[2,128,128], index: 1, kind: input, shape index: {}]
  %s2 = inlined_call_operand.hbm [shape: f32[2,128,128], index: 2, kind: input, shape index: {}]
  %s3 = inlined_call_operand.vmem [shape: f32[2,1,128], index: 3, kind: input, shape index: {}]
  %s4 = inlined_call_operand.hbm [shape: f32[128,128], index: 4, kind: input, shape index: {}]
  %s5 = inlined_call_operand.vmem [shape: f32[1,128], index: 5, kind: input, shape index: {}]
  %s6 = inlined_call_operand.hbm [shape: f32[2,8,128], index: 6, kind: output, shape index: {}]
  %s7 = sld [smem:[#allocation0]]
  $region74: #{tpu_custom_call.1} parent=0
    _
  %s9 = ssub.s32 1, %s7
  %s10 = scalar_select 0, %s9, %s7
  $region1: #{tpu_custom_call.1} parent=0
    #allocation6 [shape = 'u8[131072]{0}', space=vmem, size = 0x20000, scoped, tag = 'input window, operand 1']
    #allocation7 [shape = 's32[2]{0}', space=sflag, size = 0x8, scoped, tag = 'scoped memory for tpu_custom_call.1']
    #allocation8 [shape = 's32[2]{0}', space=sflag, size = 0x8, scoped, tag = 'scoped memory for tpu_custom_call.1']
    #allocation9 [shape = 'u8[131072]{0}', space=vmem, size = 0x20000, scoped, tag = 'input window, operand 2']
    #allocation10 [shape = 's32[2]{0}', space=sflag, size = 0x8, scoped, tag = 'scoped memory for tpu_custom_call.1']
    #allocation11 [shape = 'u8[65536]{0}', space=vmem, size = 0x10000, scoped, tag = 'input window, operand 4, single buffered']
    #allocation12 [shape = 'u8[8192]{0}', space=vmem, size = 0x2000, scoped, tag = 'output window, operand 0']
    %11 = vsyncpa [#allocation7], 0
    %s12 = scalar_lea.sflag [#allocation7], 1
    %13 = vsyncpa %s12, 0
    %14 = vsyncpa [#allocation10], 0
    %s15 = scalar_lea.sflag [#allocation10], 1
    %16 = vsyncpa %s15, 0
    %17 = vsyncpa [#allocation8], 0
    %s18 = scalar_lea.sflag [#allocation8], 1
    %19 = vsyncpa %s18, 0
    loop: start=0, step=1, limit=4
    $region2: #{tpu_custom_call.1} parent=1 // loop_pre_header
      _
    $region3: #{tpu_custom_call.1} parent=1 // loop_header
      %s21 = sphi 0, %s25
      %p22 = scmp.ge.s32.totalorder %s21, 4
      %s31 = sphi 0, %s33
      %s34 = sphi 0, %s31
      %s35 = sphi 0, %s34
      %s51 = sphi 0, %s35
      %s57 = sphi 0, %s59
      %s60 = sphi 0, %s57
      %s61 = sphi 0, %s60
      %s77 = sphi 0, %s61
      %s83 = sphi 0, %s85
      %s86 = sphi 0, %s83
      %s87 = sphi 0, %s86
      %s103 = sphi 0, %s87
      %s107 = sphi 0, %s107
      %s109 = sphi 0, %s107
      %s110 = sphi 0, %s109
      %s124 = sphi 0, %s110
      %s128 = sphi 0, %s128
      %s130 = sphi 0, %s128
      %s131 = sphi 0, %s130
      %s145 = sphi 0, %s131
      %s151 = sphi 0, %s153
      %s154 = sphi 0, %s151
      %s155 = sphi 0, %s154
      %s171 = sphi 0, %s155
    $region4: #{tpu_custom_call.1} parent=1 // loop_header_branch
      %24 = sbr.rel (%p22) target = $region8
    $region5: #{tpu_custom_call.1} parent=1 // loop_body
      %s26 = ssub.s32 %s21, 1
      %s27 = ssub.s32 %s21, 2
      %s28 = sadd.s32 %s21, 1
      %s29 = ssub.s32 %s21, %s28
      %p30 = scmp.eq.s32.totalorder %s29, 0
      %s32 = sadd.s32 %s31, 1
      %s33 = scalar_select %p30, %s31, %s32
      %p36 = pneg %p30
      %p37 = scmp.eq.s32.totalorder %s21, 1
      %p38 = por %p36, %p37
      %p39 = scmp.ne.s32.totalorder %s31, %s34
      %p40 = scmp.eq.s32.totalorder %s21, 0
      %p41 = por %p39, %p40
      %p42 = scmp.ne.s32.totalorder %s31, %s34
      %p43 = scmp.eq.s32.totalorder %s26, 1
      %p44 = por %p42, %p43
      %p45 = scmp.ne.s32.totalorder %s34, %s35
      %p46 = scmp.eq.s32.totalorder %s26, 0
      %p47 = por %p45, %p46
      %p48 = scmp.ne.s32.totalorder %s34, %s35
      %p49 = scmp.eq.s32.totalorder %s27, 1
      %p50 = por %p48, %p49
      %p52 = scmp.ne.s32.totalorder %s35, %s51
      %p53 = scmp.eq.s32.totalorder %s27, 0
      %p54 = por %p52, %p53
      %s55 = ssub.s32 %s21, %s28
      %p56 = scmp.eq.s32.totalorder %s55, 0
      %s58 = sadd.s32 %s57, 1
      %s59 = scalar_select %p56, %s57, %s58
      %p62 = pneg %p56
      %p63 = scmp.eq.s32.totalorder %s21, 1
      %p64 = por %p62, %p63
      %p65 = scmp.ne.s32.totalorder %s57, %s60
      %p66 = scmp.eq.s32.totalorder %s21, 0
      %p67 = por %p65, %p66
      %p68 = scmp.ne.s32.totalorder %s57, %s60
      %p69 = scmp.eq.s32.totalorder %s26, 1
      %p70 = por %p68, %p69
      %p71 = scmp.ne.s32.totalorder %s60, %s61
      %p72 = scmp.eq.s32.totalorder %s26, 0
      %p73 = por %p71, %p72
      %p74 = scmp.ne.s32.totalorder %s60, %s61
      %p75 = scmp.eq.s32.totalorder %s27, 1
      %p76 = por %p74, %p75
      %p78 = scmp.ne.s32.totalorder %s61, %s77
      %p79 = scmp.eq.s32.totalorder %s27, 0
      %p80 = por %p78, %p79
      %s81 = ssub.s32 %s21, %s28
      %p82 = scmp.eq.s32.totalorder %s81, 0
      %s84 = sadd.s32 %s83, 1
      %s85 = scalar_select %p82, %s83, %s84
      %p88 = pneg %p82
      %p89 = scmp.eq.s32.totalorder %s21, 1
      %p90 = por %p88, %p89
      %p91 = scmp.ne.s32.totalorder %s83, %s86
      %p92 = scmp.eq.s32.totalorder %s21, 0
      %p93 = por %p91, %p92
      %p94 = scmp.ne.s32.totalorder %s83, %s86
      %p95 = scmp.eq.s32.totalorder %s26, 1
      %p96 = por %p94, %p95
      %p97 = scmp.ne.s32.totalorder %s86, %s87
      %p98 = scmp.eq.s32.totalorder %s26, 0
      %p99 = por %p97, %p98
      %p100 = scmp.ne.s32.totalorder %s86, %s87
      %p101 = scmp.eq.s32.totalorder %s27, 1
      %p102 = por %p100, %p101
      %p104 = scmp.ne.s32.totalorder %s87, %s103
      %p105 = scmp.eq.s32.totalorder %s27, 0
      %p106 = por %p104, %p105
      %s108 = sadd.s32 %s107, 1
      %p111 = scmp.eq.s32.totalorder %s21, 1
      %p112 = scmp.ne.s32.totalorder %s107, %s109
      %p113 = scmp.eq.s32.totalorder %s21, 0
      %p114 = por %p112, %p113
      %p115 = scmp.ne.s32.totalorder %s107, %s109
      %p116 = scmp.eq.s32.totalorder %s26, 1
      %p117 = por %p115, %p116
      %p118 = scmp.ne.s32.totalorder %s109, %s110
      %p119 = scmp.eq.s32.totalorder %s26, 0
      %p120 = por %p118, %p119
      %p121 = scmp.ne.s32.totalorder %s109, %s110
      %p122 = scmp.eq.s32.totalorder %s27, 1
      %p123 = por %p121, %p122
      %p125 = scmp.ne.s32.totalorder %s110, %s124
      %p126 = scmp.eq.s32.totalorder %s27, 0
      %p127 = por %p125, %p126
      %s129 = sadd.s32 %s128, 1
      %p132 = scmp.eq.s32.totalorder %s21, 1
      %p133 = scmp.ne.s32.totalorder %s128, %s130
      %p134 = scmp.eq.s32.totalorder %s21, 0
      %p135 = por %p133, %p134
      %p136 = scmp.ne.s32.totalorder %s128, %s130
      %p137 = scmp.eq.s32.totalorder %s26, 1
      %p138 = por %p136, %p137
      %p139 = scmp.ne.s32.totalorder %s130, %s131
      %p140 = scmp.eq.s32.totalorder %s26, 0
      %p141 = por %p139, %p140
      %p142 = scmp.ne.s32.totalorder %s130, %s131
      %p143 = scmp.eq.s32.totalorder %s27, 1
      %p144 = por %p142, %p143
      %p146 = scmp.ne.s32.totalorder %s131, %s145
      %p147 = scmp.eq.s32.totalorder %s27, 0
      %p148 = por %p146, %p147
      %s149 = ssub.s32 %s21, %s28
      %p150 = scmp.eq.s32.totalorder %s149, 0
      %s152 = sadd.s32 %s151, 1
      %s153 = scalar_select %p150, %s151, %s152
      %p156 = pneg %p150
      %p157 = scmp.eq.s32.totalorder %s21, 1
      %p158 = por %p156, %p157
      %p159 = scmp.ne.s32.totalorder %s151, %s154
      %p160 = scmp.eq.s32.totalorder %s21, 0
      %p161 = por %p159, %p160
      %p162 = scmp.ne.s32.totalorder %s151, %s154
      %p163 = scmp.eq.s32.totalorder %s26, 1
      %p164 = por %p162, %p163
      %p165 = scmp.ne.s32.totalorder %s154, %s155
      %p166 = scmp.eq.s32.totalorder %s26, 0
      %p167 = por %p165, %p166
      %p168 = scmp.ne.s32.totalorder %s154, %s155
      %p169 = scmp.eq.s32.totalorder %s27, 1
      %p170 = por %p168, %p169
      %p172 = scmp.ne.s32.totalorder %s155, %s171
      %p173 = scmp.eq.s32.totalorder %s27, 0
      %p174 = por %p172, %p173
      %p175 = scmp.le.s32.totalorder 1, %s21
      %p176 = scmp.lt.s32.totalorder %s21, 3
      %p177 = pnand %p175, %p176
      %p178 = pneg %p177
      // Predicated region
      $region9: #{tpu_custom_call.1} parent=5 // pred_check
        _
      $region10: #{tpu_custom_call.1} parent=5 // pred_check_branch
        %180 = sbr.rel (%p177) target = $region12
      $region11: #{tpu_custom_call.1} parent=5 // pred_region
        %s181 = ssub.s32 %s21, 1
        // Predicated region
        $region13: #{tpu_custom_call.1} parent=11 // pred_check
          %p182 = pneg %p120
        $region14: #{tpu_custom_call.1} parent=11 // pred_check_branch
          %184 = sbr.rel (%p182) target = $region16
        $region15: #{tpu_custom_call.1} parent=11 // pred_region
          %s186 = ssub.s32 2048, 2048
          %187 = vsyncadd [#allocation10], %s186
          %s188 = sshll.u32 [#allocation11], 4
          %s189 = int_to_ptr.vmem [resolvable:$true] %s188
          %194 = dma.hbm_to_vmem [thread:$0]  %s4, 2048, %s189, [#allocation10], 128, 128, 8
        $region16: #{tpu_custom_call.1} parent=11 // pred_fallthru
          _
        // Predicated region
        $region17: #{tpu_custom_call.1} parent=11 // pred_check
          %p195 = pneg %p141
        $region18: #{tpu_custom_call.1} parent=11 // pred_check_branch
          %197 = sbr.rel (%p195) target = $region20
        $region19: #{tpu_custom_call.1} parent=11 // pred_region
          _
        $region20: #{tpu_custom_call.1} parent=11 // pred_fallthru
          _
      $region12: #{tpu_custom_call.1} parent=5 // pred_fallthru
        _
      %p198 = scmp.lt.s32.totalorder %s21, 2
      // Predicated region
      $region21: #{tpu_custom_call.1} parent=5 // pred_check
        %p199 = pneg %p198
      $region22: #{tpu_custom_call.1} parent=5 // pred_check_branch
        %201 = sbr.rel (%p199) target = $region24
      $region23: #{tpu_custom_call.1} parent=5 // pred_region
        // Predicated region
        $region25: #{tpu_custom_call.1} parent=23 // pred_check
          %p202 = pneg %p41
        $region26: #{tpu_custom_call.1} parent=23 // pred_check_branch
          %204 = sbr.rel (%p202) target = $region28
        $region27: #{tpu_custom_call.1} parent=23 // pred_region
          %s205 = sand.u32 %s31, 1
          %s206 = scalar_lea.sflag [#allocation7], %s205
          %s207 = sand.u32 %s31, 1
          %s208 = smul.addr %s207, 128
          %s209 = scalar_lea.vmem [#allocation6], %s208
          %s211 = ssub.s32 2048, 2048
          %212 = vsyncadd %s206, %s211
          %s213 = smul.addr %s21, 16
          %s214 = smul.addr %s213, 128
          %s215 = scalar_lea.hbm %s1, %s214
          %s216 = sshll.u32 %s209, 4
          %s217 = int_to_ptr.vmem [resolvable:$true] %s216
          %222 = dma.hbm_to_vmem [thread:$0]  %s215, 2048, %s217, %s206, 128, 128, 8
        $region28: #{tpu_custom_call.1} parent=23 // pred_fallthru
          _
        // Predicated region
        $region29: #{tpu_custom_call.1} parent=23 // pred_check
          %p223 = pneg %p67
        $region30: #{tpu_custom_call.1} parent=23 // pred_check_branch
          %225 = sbr.rel (%p223) target = $region32
        $region31: #{tpu_custom_call.1} parent=23 // pred_region
          %s226 = sand.u32 %s21, 1
          %s227 = scalar_lea.sflag [#allocation10], %s226
          %s228 = sand.u32 %s57, 1
          %s229 = smul.addr %s228, 128
          %s230 = scalar_lea.vmem [#allocation9], %s229
          %s232 = ssub.s32 2048, 2048
          %233 = vsyncadd %s227, %s232
          %s234 = smul.addr %s21, 16
          %s235 = smul.addr %s234, 128
          %s236 = scalar_lea.hbm %s2, %s235
          %s237 = sshll.u32 %s230, 4
          %s238 = int_to_ptr.vmem [resolvable:$true] %s237
          %243 = dma.hbm_to_vmem [thread:$0]  %s236, 2048, %s238, %s227, 128, 128, 8
        $region32: #{tpu_custom_call.1} parent=23 // pred_fallthru
          _
        // Predicated region
        $region33: #{tpu_custom_call.1} parent=23 // pred_check
          %p244 = pneg %p93
        $region34: #{tpu_custom_call.1} parent=23 // pred_check_branch
          %246 = sbr.rel (%p244) target = $region36
        $region35: #{tpu_custom_call.1} parent=23 // pred_region
          %p247 = scmp.lt.s32.totalorder %s21, 1
          %s248 = scalar_select %p247, %s21, 1
          %s249 = scalar_lea.vmem %s3, %s248
        $region36: #{tpu_custom_call.1} parent=23 // pred_fallthru
          _
      $region24: #{tpu_custom_call.1} parent=5 // pred_fallthru
        _
      %p250 = scmp.le.s32.totalorder 1, %s21
      %p251 = scmp.lt.s32.totalorder %s21, 3
      %p252 = pnand %p250, %p251
      %p253 = pneg %p252
      // Predicated region
      $region37: #{tpu_custom_call.1} parent=5 // pred_check
        _
      $region38: #{tpu_custom_call.1} parent=5 // pred_check_branch
        %255 = sbr.rel (%p252) target = $region40
      $region39: #{tpu_custom_call.1} parent=5 // pred_region
        %s256 = ssub.s32 %s21, 1
        %s257 = sand.u32 %s34, 1
        %s258 = scalar_lea.sflag [#allocation7], %s257
        %s259 = sand.u32 %s34, 1
        %s260 = smul.addr %s259, 128
        %s261 = scalar_lea.vmem [#allocation6], %s260
        // Predicated region
        $region41: #{tpu_custom_call.1} parent=39 // pred_check
          %p262 = pneg %p47
        $region42: #{tpu_custom_call.1} parent=39 // pred_check_branch
          %264 = sbr.rel (%p262) target = $region44
        $region43: #{tpu_custom_call.1} parent=39 // pred_region
          %265 = dma.done %s258, 2048
        $region44: #{tpu_custom_call.1} parent=39 // pred_fallthru
          _
        %s266 = sand.u32 %s26, 1
        %s267 = scalar_lea.sflag [#allocation10], %s266
        %s268 = sand.u32 %s60, 1
        %s269 = smul.addr %s268, 128
        %s270 = scalar_lea.vmem [#allocation9], %s269
        // Predicated region
        $region45: #{tpu_custom_call.1} parent=39 // pred_check
          %p271 = pneg %p73
        $region46: #{tpu_custom_call.1} parent=39 // pred_check_branch
          %273 = sbr.rel (%p271) target = $region48
        $region47: #{tpu_custom_call.1} parent=39 // pred_region
          %274 = dma.done %s267, 2048
        $region48: #{tpu_custom_call.1} parent=39 // pred_fallthru
          _
        // Predicated region
        $region49: #{tpu_custom_call.1} parent=39 // pred_check
          %p275 = pneg %p120
        $region50: #{tpu_custom_call.1} parent=39 // pred_check_branch
          %277 = sbr.rel (%p275) target = $region52
        $region51: #{tpu_custom_call.1} parent=39 // pred_region
          %278 = dma.done [#allocation10], 2048
        $region52: #{tpu_custom_call.1} parent=39 // pred_fallthru
          _
        %s279 = sand.u32 %s34, 1
        %s280 = scalar_lea.sflag [#allocation7], %s279
        %s281 = sand.u32 %s34, 1
        %s282 = smul.addr %s281, 128
        %s283 = scalar_lea.vmem [#allocation6], %s282
        %p284 = pneg %p47
        %p285 = pneg %p44
        %s286 = sand.u32 %s26, 1
        %s287 = scalar_lea.sflag [#allocation10], %s286
        %s288 = sand.u32 %s60, 1
        %s289 = smul.addr %s288, 128
        %s290 = scalar_lea.vmem [#allocation9], %s289
        %p291 = pneg %p73
        %p292 = pneg %p70
        %p293 = scmp.lt.s32.totalorder %s26, 1
        %s294 = scalar_select %p293, %s26, 1
        %s295 = scalar_lea.vmem %s3, %s294
        %p296 = pneg %p99
        %p297 = pneg %p96
        %p298 = pneg %p120
        %p299 = pneg %p117
        %p300 = pneg %p141
        %p301 = pneg %p138
        %p302 = pneg %p167
        %p303 = pneg %p164
        %s304 = sand.u32 %s154, 1
        %s305 = scalar_lea.sflag [#allocation8], %s304
        %s306 = sand.u32 %s154, 1
        %s307 = smul.addr %s306, 8
        %s308 = scalar_lea.vmem [#allocation12], %s307
        %p309 = scmp.lt.s32.totalorder %s26, 1
        %s310 = scalar_select %p309, %s26, 1
        %s311 = scalar_lea.vmem %s3, %s310
        %p312 = scmp.eq.s32.totalorder %s26, 0
        // Predicated region
        $region53: #{tpu_custom_call.1} parent=39 // pred_check
          %p313 = pneg %p312
        $region54: #{tpu_custom_call.1} parent=39 // pred_check_branch
          %315 = sbr.rel (%p313) target = $region56
        $region55: #{tpu_custom_call.1} parent=39 // pred_region
          $region57: #{tpu_custom_call.1} parent=55
            #allocation13 [shape = 's32[1]{0}', space=sflag, size = 0x4, scoped, tag = 'scoped memory for tpu_custom_call.1']
            // Predicated region
            $region58: #{tpu_custom_call.1} parent=57 // pred_check
              _
            $region59: #{tpu_custom_call.1} parent=57 // pred_check_branch
              %317 = sbr.rel target = $region61
            $region60: #{tpu_custom_call.1} parent=57 // pred_region
              %318 = sst [smem:[#allocation16]] [#allocation15]
              %319 = sst [smem:[#allocation17]] [#allocation14]
            $region61: #{tpu_custom_call.1} parent=57 // pred_fallthru
              _
            %321 = shalt.err (0)
            %s323 = sshll.u32 [#allocation2], 4
            %s324 = int_to_ptr.vmem [resolvable:$true] %s323
            %326 = dma.hbm_to_vmem [thread:$0]  %s0, 1024, %s324, [#allocation13]
            %s327 = smul.u32 8, 8
            %s328 = smul.u32 %s327, 1
            %s329 = sshll.u32 %s328, 4
            %330 = dma.done [#allocation13], %s329
        $region56: #{tpu_custom_call.1} parent=39 // pred_fallthru
          _
        %v331 = vld [vmem:[%s311] sm:$0x1]
        %v332 = vld [vmem:[#allocation2] sm:$0xff]
        %v333 = vld [vmem:[#allocation2 + $0x8] sm:$0xff]
        %v334 = vld [vmem:[#allocation2 + $0x10] sm:$0xff]
        %v335 = vld [vmem:[#allocation2 + $0x18] sm:$0xff]
        %v336 = vld [vmem:[#allocation2 + $0x20] sm:$0xff]
        %v337 = vld [vmem:[#allocation2 + $0x28] sm:$0xff]
        %v338 = vld [vmem:[#allocation2 + $0x30] sm:$0xff]
        %v339 = vld [vmem:[#allocation2 + $0x38] sm:$0xff]
        %v340 = vld [vmem:[%s261] sm:$0xff]
        %v341 = vld [vmem:[%s261 + $0x8] sm:$0xff]
        %v342 = vld [vmem:[%s261 + $0x10] sm:$0xff]
        %v343 = vld [vmem:[%s261 + $0x18] sm:$0xff]
        %v344 = vld [vmem:[%s261 + $0x20] sm:$0xff]
        %v345 = vld [vmem:[%s261 + $0x28] sm:$0xff]
        %v346 = vld [vmem:[%s261 + $0x30] sm:$0xff]
        %v347 = vld [vmem:[%s261 + $0x38] sm:$0xff]
        %v348 = vld [vmem:[%s261 + $0x40] sm:$0xff]
        %v349 = vld [vmem:[%s261 + $0x48] sm:$0xff]
        %v350 = vld [vmem:[%s261 + $0x50] sm:$0xff]
        %v351 = vld [vmem:[%s261 + $0x58] sm:$0xff]
        %v352 = vld [vmem:[%s261 + $0x60] sm:$0xff]
        %v353 = vld [vmem:[%s261 + $0x68] sm:$0xff]
        %v354 = vld [vmem:[%s261 + $0x70] sm:$0xff]
        %v355 = vld [vmem:[%s261 + $0x78] sm:$0xff]
        %v357 = vlaneseq
        %v358 = vshrl.u32 %v357, 7
        %v359 = vsub.s32 0, %v358
        %v360 = vrot.slane %v331, %v359
        %362 = vmatprep.subr.mxu0 0.0
        %363 = vmatpush1.msra.mxu0 %v340
        %364 = vmatprep.subr.mxu0 0.0
        %365 = vmatpush1.msra.mxu0 %v341
        %366 = vmatprep.subr.mxu0 0.0
        %367 = vmatpush1.msra.mxu0 %v342
        %368 = vmatprep.subr.mxu0 0.0
        %369 = vmatpush1.msra.mxu0 %v343
        %370 = vmatprep.subr.mxu0 0.0
        %371 = vmatpush1.msra.mxu0 %v344
        %372 = vmatprep.subr.mxu0 0.0
        %373 = vmatpush1.msra.mxu0 %v345
        %374 = vmatprep.subr.mxu0 0.0
        %375 = vmatpush1.msra.mxu0 %v346
        %376 = vmatprep.subr.mxu0 0.0
        %377 = vmatpush1.msra.mxu0 %v347
        %378 = vmatprep.subr.mxu0 0.0
        %379 = vmatpush1.msra.mxu0 %v348
        %380 = vmatprep.subr.mxu0 0.0
        %381 = vmatpush1.msra.mxu0 %v349
        %382 = vmatprep.subr.mxu0 0.0
        %383 = vmatpush1.msra.mxu0 %v350
        %384 = vmatprep.subr.mxu0 0.0
        %385 = vmatpush1.msra.mxu0 %v351
        %386 = vmatprep.subr.mxu0 0.0
        %387 = vmatpush1.msra.mxu0 %v352
        %388 = vmatprep.subr.mxu0 0.0
        %389 = vmatpush1.msra.mxu0 %v353
        %390 = vmatprep.subr.mxu0 0.0
        %391 = vmatpush1.msra.mxu0 %v354
        %392 = vmatprep.subr.mxu0 0.0
        %393 = vmatpush1.msra.mxu0 %v355
        %394 = vmatprep.subr.mxu0 0.0
        %395 = vmatpush1.msra.mxu0 0.0
        %396 = vmatprep.subr.mxu0 0.0
        %397 = vmatpush1.msra.mxu0 0.0
        %398 = vmatprep.subr.mxu0 0.0
        %399 = vmatpush1.msra.mxu0 0.0
        %400 = vmatprep.subr.mxu0 0.0
        %401 = vmatpush1.msra.mxu0 0.0
        %402 = vmatprep.subr.mxu0 0.0
        %403 = vmatpush1.msra.mxu0 0.0
        %404 = vmatprep.subr.mxu0 0.0
        %405 = vmatpush1.msra.mxu0 0.0
        %406 = vmatprep.subr.mxu0 0.0
        %407 = vmatpush1.msra.mxu0 0.0
        %408 = vmatprep.subr.mxu0 0.0
        %409 = vmatpush1.msra.mxu0 0.0
        %410 = vmatprep.subr.mxu0 0.0
        %411 = vmatpush1.msra.mxu0 0.0
        %412 = vmatprep.subr.mxu0 0.0
        %413 = vmatpush1.msra.mxu0 0.0
        %414 = vmatprep.subr.mxu0 0.0
        %415 = vmatpush1.msra.mxu0 0.0
        %416 = vmatprep.subr.mxu0 0.0
        %417 = vmatpush1.msra.mxu0 0.0
        %418 = vmatprep.subr.mxu0 0.0
        %419 = vmatpush1.msra.mxu0 0.0
        %420 = vmatprep.subr.mxu0 0.0
        %421 = vmatpush1.msra.mxu0 0.0
        %422 = vmatprep.subr.mxu0 0.0
        %423 = vmatpush1.msra.mxu0 0.0
        %424 = vmatprep.subr.mxu0 0.0
        %425 = vmatpush1.msra.mxu0 0.0
        %426 = vmatprep.mubr.f32.mxu0 0.0
        %427 = vmatmul.mubr.f32.gmra.mrb[0].mxu0 %v332
        %v428 = vpop.f32.mrb[0].mxu0
        %v429 = vadd.f32 %v360, %v428
        %v430 = vpop.f32.mrb[0].mxu0
        %431 = vmatprep.mubr.f32.mxu0 0.0
        %432 = vmatmul.mubr.f32.gmra.mrb[0].mxu0 %v333
        %v433 = vpop.f32.mrb[0].mxu0
        %v434 = vadd.f32 %v360, %v433
        %v435 = vpop.f32.mrb[0].mxu0
        %436 = vmatprep.mubr.f32.mxu0 0.0
        %437 = vmatmul.mubr.f32.gmra.mrb[0].mxu0 %v334
        %v438 = vpop.f32.mrb[0].mxu0
        %v439 = vadd.f32 %v360, %v438
        %v440 = vpop.f32.mrb[0].mxu0
        %441 = vmatprep.mubr.f32.mxu0 0.0
        %442 = vmatmul.mubr.f32.gmra.mrb[0].mxu0 %v335
        %v443 = vpop.f32.mrb[0].mxu0
        %v444 = vadd.f32 %v360, %v443
        %v445 = vpop.f32.mrb[0].mxu0
        %446 = vmatprep.mubr.f32.mxu0 0.0
        %447 = vmatmul.mubr.f32.gmra.mrb[0].mxu0 %v336
        %v448 = vpop.f32.mrb[0].mxu0
        %v449 = vadd.f32 %v360, %v448
        %v450 = vpop.f32.mrb[0].mxu0
        %451 = vmatprep.mubr.f32.mxu0 0.0
        %452 = vmatmul.mubr.f32.gmra.mrb[0].mxu0 %v337
        %v453 = vpop.f32.mrb[0].mxu0
        %v454 = vadd.f32 %v360, %v453
        %v455 = vpop.f32.mrb[0].mxu0
        %456 = vmatprep.mubr.f32.mxu0 0.0
        %457 = vmatmul.mubr.f32.gmra.mrb[0].mxu0 %v338
        %v458 = vpop.f32.mrb[0].mxu0
        %v459 = vadd.f32 %v360, %v458
        %v460 = vpop.f32.mrb[0].mxu0
        %461 = vmatprep.mubr.f32.mxu0 0.0
        %462 = vmatmul.mubr.f32.gmra.mrb[0].mxu0 %v339
        %v463 = vpop.f32.mrb[0].mxu0
        %v464 = vadd.f32 %v360, %v463
        %v465 = vpop.f32.mrb[0].mxu0
        %466 = vdwg.mxu0
        %467 = vst [vmem:[#allocation3] sm:$0xff] %v429
        %468 = vst [vmem:[#allocation3 + $0x8] sm:$0xff] %v434
        %469 = vst [vmem:[#allocation3 + $0x10] sm:$0xff] %v439
        %470 = vst [vmem:[#allocation3 + $0x18] sm:$0xff] %v444
        %471 = vst [vmem:[#allocation3 + $0x20] sm:$0xff] %v449
        %472 = vst [vmem:[#allocation3 + $0x28] sm:$0xff] %v454
        %473 = vst [vmem:[#allocation3 + $0x30] sm:$0xff] %v459
        %474 = vst [vmem:[#allocation3 + $0x38] sm:$0xff] %v464
        %475 = vst [vmem:[#allocation4] sm:$0xff] 0.0
        %476 = vst [vmem:[#allocation5] sm:$0xff] 0.0
        %v477 = vlaneseq
        %v478 = vand.u32 %v477, 127
        %vm479 = vcmp.ge.s32.totalorder %v478, 64
        %vm480 = vcmp.lt.s32.totalorder %v478, 96
        %vm481 = vmand %vm479, %vm480
        %v482 = vld [vmem:[#allocation3] sm:$0xff]
        %v483 = vld [vmem:[#allocation4] sm:$0xff]
        %v484 = vld [vmem:[%s270] sm:$0xff]
        %v485 = vld [vmem:[%s270 + $0x8] sm:$0xff]
        %v486 = vld [vmem:[%s270 + $0x10] sm:$0xff]
        %v487 = vld [vmem:[%s270 + $0x18] sm:$0xff]
        %v488 = vld [vmem:[%s270 + $0x20] sm:$0xff]
        %v489 = vld [vmem:[%s270 + $0x28] sm:$0xff]
        %v490 = vld [vmem:[%s270 + $0x30] sm:$0xff]
        %v491 = vld [vmem:[%s270 + $0x38] sm:$0xff]
        %v492 = vld [vmem:[%s270 + $0x40] sm:$0xff]
        %v493 = vld [vmem:[%s270 + $0x48] sm:$0xff]
        %v494 = vld [vmem:[%s270 + $0x50] sm:$0xff]
        %v495 = vld [vmem:[%s270 + $0x58] sm:$0xff]
        %v496 = vld [vmem:[%s270 + $0x60] sm:$0xff]
        %v497 = vld [vmem:[%s270 + $0x68] sm:$0xff]
        %v498 = vld [vmem:[%s270 + $0x70] sm:$0xff]
        %v499 = vld [vmem:[%s270 + $0x78] sm:$0xff]
        %500 = vmatprep.subr.mxu0 0.0
        %501 = vmatpush1.msra.mxu0 %v484
        %502 = vmatprep.subr.mxu0 0.0
        %503 = vmatpush1.msra.mxu0 %v485
        %504 = vmatprep.subr.mxu0 0.0
        %505 = vmatpush1.msra.mxu0 %v486
        %506 = vmatprep.subr.mxu0 0.0
        %507 = vmatpush1.msra.mxu0 %v487
        %508 = vmatprep.subr.mxu0 0.0
        %509 = vmatpush1.msra.mxu0 %v488
        %510 = vmatprep.subr.mxu0 0.0
        %511 = vmatpush1.msra.mxu0 %v489
        %512 = vmatprep.subr.mxu0 0.0
        %513 = vmatpush1.msra.mxu0 %v490
        %514 = vmatprep.subr.mxu0 0.0
        %515 = vmatpush1.msra.mxu0 %v491
        %516 = vmatprep.subr.mxu0 0.0
        %517 = vmatpush1.msra.mxu0 %v492
        %518 = vmatprep.subr.mxu0 0.0
        %519 = vmatpush1.msra.mxu0 %v493
        %520 = vmatprep.subr.mxu0 0.0
        %521 = vmatpush1.msra.mxu0 %v494
        %522 = vmatprep.subr.mxu0 0.0
        %523 = vmatpush1.msra.mxu0 %v495
        %524 = vmatprep.subr.mxu0 0.0
        %525 = vmatpush1.msra.mxu0 %v496
        %526 = vmatprep.subr.mxu0 0.0
        %527 = vmatpush1.msra.mxu0 %v497
        %528 = vmatprep.subr.mxu0 0.0
        %529 = vmatpush1.msra.mxu0 %v498
        %530 = vmatprep.subr.mxu0 0.0
        %531 = vmatpush1.msra.mxu0 %v499
        %532 = vmatprep.subr.mxu0 0.0
        %533 = vmatpush1.msra.mxu0 0.0
        %534 = vmatprep.subr.mxu0 0.0
        %535 = vmatpush1.msra.mxu0 0.0
        %536 = vmatprep.subr.mxu0 0.0
        %537 = vmatpush1.msra.mxu0 0.0
        %538 = vmatprep.subr.mxu0 0.0
        %539 = vmatpush1.msra.mxu0 0.0
        %540 = vmatprep.subr.mxu0 0.0
        %541 = vmatpush1.msra.mxu0 0.0
        %542 = vmatprep.subr.mxu0 0.0
        %543 = vmatpush1.msra.mxu0 0.0
        %544 = vmatprep.subr.mxu0 0.0
        %545 = vmatpush1.msra.mxu0 0.0
        %546 = vmatprep.subr.mxu0 0.0
        %547 = vmatpush1.msra.mxu0 0.0
        %548 = vmatprep.subr.mxu0 0.0
        %549 = vmatpush1.msra.mxu0 0.0
        %550 = vmatprep.subr.mxu0 0.0
        %551 = vmatpush1.msra.mxu0 0.0
        %552 = vmatprep.subr.mxu0 0.0
        %553 = vmatpush1.msra.mxu0 0.0
        %554 = vmatprep.subr.mxu0 0.0
        %555 = vmatpush1.msra.mxu0 0.0
        %556 = vmatprep.subr.mxu0 0.0
        %557 = vmatpush1.msra.mxu0 0.0
        %558 = vmatprep.subr.mxu0 0.0
        %559 = vmatpush1.msra.mxu0 0.0
        %560 = vmatprep.subr.mxu0 0.0
        %561 = vmatpush1.msra.mxu0 0.0
        %562 = vmatprep.subr.mxu0 0.0
        %563 = vmatpush1.msra.mxu0 0.0
        %564 = vmatprep.mubr.f32.mxu0 0.0
        %565 = vmatmul.mubr.f32.gmra.mrb[0].mxu0 %v483
        %v566 = vpop.f32.mrb[0].mxu0
        %v567 = vadd.f32 0.0, %v566
        %v568 = vpop.f32.mrb[0].mxu0
        %569 = vdwg.mxu0
        %v570 = vadd.f32 %v482, %v567
        %v571 = vmul.f32 %v570, 2.0
        %v572 = vsel %vm481, %v571, %v570
        %v573 = vxor.u32 %v572, 2147483648
        %v574 = vmul.f32 %v573, 1.442695
        %v575 = vpow.pop %v574
        %v576 = vadd.f32 %v575, 1.0
        %v577 = vrcp.pop %v576
        %v578 = vmul.f32 1.0, %v577
        %v579 = vmul.f32 %v578, 2.0
        %v580 = vsub.f32 %v579, 1.0
        %v581 = vsel %vm481, %v580, %v578
        %582 = vrot.lane.b32.xlu0 %v581, 96
        %v583 = vpop.permute.xlu0 %582
        %584 = vrot.lane.b32.xlu0 %v581, 64
        %v585 = vpop.permute.xlu0 %584
        %586 = vrot.lane.b32.xlu0 %v581, 32
        %v587 = vpop.permute.xlu0 %586
        %v588 = vld [vmem:[#allocation5] sm:$0xff]
        %v589 = vmul.f32 %v583, %v588
        %v590 = vmul.f32 %v581, %v585
        %v591 = vadd.f32 %v589, %v590
        %v592 = vtanh.pop %v591
        %v593 = vmul.f32 %v587, %v592
        %594 = vst [vmem:[#allocation5] sm:$0xff] %v591
        %595 = vst [vmem:[#allocation4] sm:$0xff] %v593
        %596 = vst [vmem:[#allocation2] sm:$0xff] %v593
        %s597 = scalar_lea.vmem [#allocation3], 8
        %v598 = vld [vmem:[%s597] sm:$0xff]
        %v599 = vld [vmem:[#allocation4] sm:$0xff]
        %v600 = vld [vmem:[%s270] sm:$0xff]
        %v601 = vld [vmem:[%s270 + $0x8] sm:$0xff]
        %v602 = vld [vmem:[%s270 + $0x10] sm:$0xff]
        %v603 = vld [vmem:[%s270 + $0x18] sm:$0xff]
        %v604 = vld [vmem:[%s270 + $0x20] sm:$0xff]
        %v605 = vld [vmem:[%s270 + $0x28] sm:$0xff]
        %v606 = vld [vmem:[%s270 + $0x30] sm:$0xff]
        %v607 = vld [vmem:[%s270 + $0x38] sm:$0xff]
        %v608 = vld [vmem:[%s270 + $0x40] sm:$0xff]
        %v609 = vld [vmem:[%s270 + $0x48] sm:$0xff]
        %v610 = vld [vmem:[%s270 + $0x50] sm:$0xff]
        %v611 = vld [vmem:[%s270 + $0x58] sm:$0xff]
        %v612 = vld [vmem:[%s270 + $0x60] sm:$0xff]
        %v613 = vld [vmem:[%s270 + $0x68] sm:$0xff]
        %v614 = vld [vmem:[%s270 + $0x70] sm:$0xff]
        %v615 = vld [vmem:[%s270 + $0x78] sm:$0xff]
        %616 = vmatprep.subr.mxu0 0.0
        %617 = vmatpush1.msra.mxu0 %v600
        %618 = vmatprep.subr.mxu0 0.0
        %619 = vmatpush1.msra.mxu0 %v601
        %620 = vmatprep.subr.mxu0 0.0
        %621 = vmatpush1.msra.mxu0 %v602
        %622 = vmatprep.subr.mxu0 0.0
        %623 = vmatpush1.msra.mxu0 %v603
        %624 = vmatprep.subr.mxu0 0.0
        %625 = vmatpush1.msra.mxu0 %v604
        %626 = vmatprep.subr.mxu0 0.0
        %627 = vmatpush1.msra.mxu0 %v605
        %628 = vmatprep.subr.mxu0 0.0
        %629 = vmatpush1.msra.mxu0 %v606
        %630 = vmatprep.subr.mxu0 0.0
        %631 = vmatpush1.msra.mxu0 %v607
        %632 = vmatprep.subr.mxu0 0.0
        %633 = vmatpush1.msra.mxu0 %v608
        %634 = vmatprep.subr.mxu0 0.0
        %635 = vmatpush1.msra.mxu0 %v609
        %636 = vmatprep.subr.mxu0 0.0
        %637 = vmatpush1.msra.mxu0 %v610
        %638 = vmatprep.subr.mxu0 0.0
        %639 = vmatpush1.msra.mxu0 %v611
        %640 = vmatprep.subr.mxu0 0.0
        %641 = vmatpush1.msra.mxu0 %v612
        %642 = vmatprep.subr.mxu0 0.0
        %643 = vmatpush1.msra.mxu0 %v613
        %644 = vmatprep.subr.mxu0 0.0
        %645 = vmatpush1.msra.mxu0 %v614
        %646 = vmatprep.subr.mxu0 0.0
        %647 = vmatpush1.msra.mxu0 %v615
        %648 = vmatprep.subr.mxu0 0.0
        %649 = vmatpush1.msra.mxu0 0.0
        %650 = vmatprep.subr.mxu0 0.0
        %651 = vmatpush1.msra.mxu0 0.0
        %652 = vmatprep.subr.mxu0 0.0
        %653 = vmatpush1.msra.mxu0 0.0
        %654 = vmatprep.subr.mxu0 0.0
        %655 = vmatpush1.msra.mxu0 0.0
        %656 = vmatprep.subr.mxu0 0.0
        %657 = vmatpush1.msra.mxu0 0.0
        %658 = vmatprep.subr.mxu0 0.0
        %659 = vmatpush1.msra.mxu0 0.0
        %660 = vmatprep.subr.mxu0 0.0
        %661 = vmatpush1.msra.mxu0 0.0
        %662 = vmatprep.subr.mxu0 0.0
        %663 = vmatpush1.msra.mxu0 0.0
        %664 = vmatprep.subr.mxu0 0.0
        %665 = vmatpush1.msra.mxu0 0.0
        %666 = vmatprep.subr.mxu0 0.0
        %667 = vmatpush1.msra.mxu0 0.0
        %668 = vmatprep.subr.mxu0 0.0
        %669 = vmatpush1.msra.mxu0 0.0
        %670 = vmatprep.subr.mxu0 0.0
        %671 = vmatpush1.msra.mxu0 0.0
        %672 = vmatprep.subr.mxu0 0.0
        %673 = vmatpush1.msra.mxu0 0.0
        %674 = vmatprep.subr.mxu0 0.0
        %675 = vmatpush1.msra.mxu0 0.0
        %676 = vmatprep.subr.mxu0 0.0
        %677 = vmatpush1.msra.mxu0 0.0
        %678 = vmatprep.subr.mxu0 0.0
        %679 = vmatpush1.msra.mxu0 0.0
        %680 = vmatprep.mubr.f32.mxu0 0.0
        %681 = vmatmul.mubr.f32.gmra.mrb[0].mxu0 %v599
        %v682 = vpop.f32.mrb[0].mxu0
        %v683 = vadd.f32 0.0, %v682
        %v684 = vpop.f32.mrb[0].mxu0
        %685 = vdwg.mxu0
        %v686 = vadd.f32 %v598, %v683
        %v687 = vmul.f32 %v686, 2.0
        %v688 = vsel %vm481, %v687, %v686
        %v689 = vxor.u32 %v688, 2147483648
        %v690 = vmul.f32 %v689, 1.442695
        %v691 = vpow.pop %v690
        %v692 = vadd.f32 %v691, 1.0
        %v693 = vrcp.pop %v692
        %v694 = vmul.f32 1.0, %v693
        %v695 = vmul.f32 %v694, 2.0
        %v696 = vsub.f32 %v695, 1.0
        %v697 = vsel %vm481, %v696, %v694
        %698 = vrot.lane.b32.xlu0 %v697, 96
        %v699 = vpop.permute.xlu0 %698
        %700 = vrot.lane.b32.xlu0 %v697, 64
        %v701 = vpop.permute.xlu0 %700
        %702 = vrot.lane.b32.xlu0 %v697, 32
        %v703 = vpop.permute.xlu0 %702
        %v704 = vld [vmem:[#allocation5] sm:$0xff]
        %v705 = vmul.f32 %v699, %v704
        %v706 = vmul.f32 %v697, %v701
        %v707 = vadd.f32 %v705, %v706
        %v708 = vtanh.pop %v707
        %v709 = vmul.f32 %v703, %v708
        %710 = vst [vmem:[#allocation5] sm:$0xff] %v707
        %711 = vst [vmem:[#allocation4] sm:$0xff] %v709
        %s712 = scalar_lea.vmem [#allocation2], 8
        %713 = vst [vmem:[%s712] sm:$0xff] %v709
        %s714 = scalar_lea.vmem [#allocation3], 16
        %v715 = vld [vmem:[%s714] sm:$0xff]
        %v716 = vld [vmem:[#allocation4] sm:$0xff]
        %v717 = vld [vmem:[%s270] sm:$0xff]
        %v718 = vld [vmem:[%s270 + $0x8] sm:$0xff]
        %v719 = vld [vmem:[%s270 + $0x10] sm:$0xff]
        %v720 = vld [vmem:[%s270 + $0x18] sm:$0xff]
        %v721 = vld [vmem:[%s270 + $0x20] sm:$0xff]
        %v722 = vld [vmem:[%s270 + $0x28] sm:$0xff]
        %v723 = vld [vmem:[%s270 + $0x30] sm:$0xff]
        %v724 = vld [vmem:[%s270 + $0x38] sm:$0xff]
        %v725 = vld [vmem:[%s270 + $0x40] sm:$0xff]
        %v726 = vld [vmem:[%s270 + $0x48] sm:$0xff]
        %v727 = vld [vmem:[%s270 + $0x50] sm:$0xff]
        %v728 = vld [vmem:[%s270 + $0x58] sm:$0xff]
        %v729 = vld [vmem:[%s270 + $0x60] sm:$0xff]
        %v730 = vld [vmem:[%s270 + $0x68] sm:$0xff]
        %v731 = vld [vmem:[%s270 + $0x70] sm:$0xff]
        %v732 = vld [vmem:[%s270 + $0x78] sm:$0xff]
        %733 = vmatprep.subr.mxu0 0.0
        %734 = vmatpush1.msra.mxu0 %v717
        %735 = vmatprep.subr.mxu0 0.0
        %736 = vmatpush1.msra.mxu0 %v718
        %737 = vmatprep.subr.mxu0 0.0
        %738 = vmatpush1.msra.mxu0 %v719
        %739 = vmatprep.subr.mxu0 0.0
        %740 = vmatpush1.msra.mxu0 %v720
        %741 = vmatprep.subr.mxu0 0.0
        %742 = vmatpush1.msra.mxu0 %v721
        %743 = vmatprep.subr.mxu0 0.0
        %744 = vmatpush1.msra.mxu0 %v722
        %745 = vmatprep.subr.mxu0 0.0
        %746 = vmatpush1.msra.mxu0 %v723
        %747 = vmatprep.subr.mxu0 0.0
        %748 = vmatpush1.msra.mxu0 %v724
        %749 = vmatprep.subr.mxu0 0.0
        %750 = vmatpush1.msra.mxu0 %v725
        %751 = vmatprep.subr.mxu0 0.0
        %752 = vmatpush1.msra.mxu0 %v726
        %753 = vmatprep.subr.mxu0 0.0
        %754 = vmatpush1.msra.mxu0 %v727
        %755 = vmatprep.subr.mxu0 0.0
        %756 = vmatpush1.msra.mxu0 %v728
        %757 = vmatprep.subr.mxu0 0.0
        %758 = vmatpush1.msra.mxu0 %v729
        %759 = vmatprep.subr.mxu0 0.0
        %760 = vmatpush1.msra.mxu0 %v730
        %761 = vmatprep.subr.mxu0 0.0
        %762 = vmatpush1.msra.mxu0 %v731
        %763 = vmatprep.subr.mxu0 0.0
        %764 = vmatpush1.msra.mxu0 %v732
        %765 = vmatprep.subr.mxu0 0.0
        %766 = vmatpush1.msra.mxu0 0.0
        %767 = vmatprep.subr.mxu0 0.0
        %768 = vmatpush1.msra.mxu0 0.0
        %769 = vmatprep.subr.mxu0 0.0
        %770 = vmatpush1.msra.mxu0 0.0
        %771 = vmatprep.subr.mxu0 0.0
        %772 = vmatpush1.msra.mxu0 0.0
        %773 = vmatprep.subr.mxu0 0.0
        %774 = vmatpush1.msra.mxu0 0.0
        %775 = vmatprep.subr.mxu0 0.0
        %776 = vmatpush1.msra.mxu0 0.0
        %777 = vmatprep.subr.mxu0 0.0
        %778 = vmatpush1.msra.mxu0 0.0
        %779 = vmatprep.subr.mxu0 0.0
        %780 = vmatpush1.msra.mxu0 0.0
        %781 = vmatprep.subr.mxu0 0.0
        %782 = vmatpush1.msra.mxu0 0.0
        %783 = vmatprep.subr.mxu0 0.0
        %784 = vmatpush1.msra.mxu0 0.0
        %785 = vmatprep.subr.mxu0 0.0
        %786 = vmatpush1.msra.mxu0 0.0
        %787 = vmatprep.subr.mxu0 0.0
        %788 = vmatpush1.msra.mxu0 0.0
        %789 = vmatprep.subr.mxu0 0.0
        %790 = vmatpush1.msra.mxu0 0.0
        %791 = vmatprep.subr.mxu0 0.0
        %792 = vmatpush1.msra.mxu0 0.0
        %793 = vmatprep.subr.mxu0 0.0
        %794 = vmatpush1.msra.mxu0 0.0
        %795 = vmatprep.subr.mxu0 0.0
        %796 = vmatpush1.msra.mxu0 0.0
        %797 = vmatprep.mubr.f32.mxu0 0.0
        %798 = vmatmul.mubr.f32.gmra.mrb[0].mxu0 %v716
        %v799 = vpop.f32.mrb[0].mxu0
        %v800 = vadd.f32 0.0, %v799
        %v801 = vpop.f32.mrb[0].mxu0
        %802 = vdwg.mxu0
        %v803 = vadd.f32 %v715, %v800
        %v804 = vmul.f32 %v803, 2.0
        %v805 = vsel %vm481, %v804, %v803
        %v806 = vxor.u32 %v805, 2147483648
        %v807 = vmul.f32 %v806, 1.442695
        %v808 = vpow.pop %v807
        %v809 = vadd.f32 %v808, 1.0
        %v810 = vrcp.pop %v809
        %v811 = vmul.f32 1.0, %v810
        %v812 = vmul.f32 %v811, 2.0
        %v813 = vsub.f32 %v812, 1.0
        %v814 = vsel %vm481, %v813, %v811
        %815 = vrot.lane.b32.xlu0 %v814, 96
        %v816 = vpop.permute.xlu0 %815
        %817 = vrot.lane.b32.xlu0 %v814, 64
        %v818 = vpop.permute.xlu0 %817
        %819 = vrot.lane.b32.xlu0 %v814, 32
        %v820 = vpop.permute.xlu0 %819
        %v821 = vld [vmem:[#allocation5] sm:$0xff]
        %v822 = vmul.f32 %v816, %v821
        %v823 = vmul.f32 %v814, %v818
        %v824 = vadd.f32 %v822, %v823
        %v825 = vtanh.pop %v824
        %v826 = vmul.f32 %v820, %v825
        %827 = vst [vmem:[#allocation5] sm:$0xff] %v824
        %828 = vst [vmem:[#allocation4] sm:$0xff] %v826
        %s829 = scalar_lea.vmem [#allocation2], 16
        %830 = vst [vmem:[%s829] sm:$0xff] %v826
        %s831 = scalar_lea.vmem [#allocation3], 24
        %v832 = vld [vmem:[%s831] sm:$0xff]
        %v833 = vld [vmem:[#allocation4] sm:$0xff]
        %v834 = vld [vmem:[%s270] sm:$0xff]
        %v835 = vld [vmem:[%s270 + $0x8] sm:$0xff]
        %v836 = vld [vmem:[%s270 + $0x10] sm:$0xff]
        %v837 = vld [vmem:[%s270 + $0x18] sm:$0xff]
        %v838 = vld [vmem:[%s270 + $0x20] sm:$0xff]
        %v839 = vld [vmem:[%s270 + $0x28] sm:$0xff]
        %v840 = vld [vmem:[%s270 + $0x30] sm:$0xff]
        %v841 = vld [vmem:[%s270 + $0x38] sm:$0xff]
        %v842 = vld [vmem:[%s270 + $0x40] sm:$0xff]
        %v843 = vld [vmem:[%s270 + $0x48] sm:$0xff]
        %v844 = vld [vmem:[%s270 + $0x50] sm:$0xff]
        %v845 = vld [vmem:[%s270 + $0x58] sm:$0xff]
        %v846 = vld [vmem:[%s270 + $0x60] sm:$0xff]
        %v847 = vld [vmem:[%s270 + $0x68] sm:$0xff]
        %v848 = vld [vmem:[%s270 + $0x70] sm:$0xff]
        %v849 = vld [vmem:[%s270 + $0x78] sm:$0xff]
        %850 = vmatprep.subr.mxu0 0.0
        %851 = vmatpush1.msra.mxu0 %v834
        %852 = vmatprep.subr.mxu0 0.0
        %853 = vmatpush1.msra.mxu0 %v835
        %854 = vmatprep.subr.mxu0 0.0
        %855 = vmatpush1.msra.mxu0 %v836
        %856 = vmatprep.subr.mxu0 0.0
        %857 = vmatpush1.msra.mxu0 %v837
        %858 = vmatprep.subr.mxu0 0.0
        %859 = vmatpush1.msra.mxu0 %v838
        %860 = vmatprep.subr.mxu0 0.0
        %861 = vmatpush1.msra.mxu0 %v839
        %862 = vmatprep.subr.mxu0 0.0
        %863 = vmatpush1.msra.mxu0 %v840
        %864 = vmatprep.subr.mxu0 0.0
        %865 = vmatpush1.msra.mxu0 %v841
        %866 = vmatprep.subr.mxu0 0.0
        %867 = vmatpush1.msra.mxu0 %v842
        %868 = vmatprep.subr.mxu0 0.0
        %869 = vmatpush1.msra.mxu0 %v843
        %870 = vmatprep.subr.mxu0 0.0
        %871 = vmatpush1.msra.mxu0 %v844
        %872 = vmatprep.subr.mxu0 0.0
        %873 = vmatpush1.msra.mxu0 %v845
        %874 = vmatprep.subr.mxu0 0.0
        %875 = vmatpush1.msra.mxu0 %v846
        %876 = vmatprep.subr.mxu0 0.0
        %877 = vmatpush1.msra.mxu0 %v847
        %878 = vmatprep.subr.mxu0 0.0
        %879 = vmatpush1.msra.mxu0 %v848
        %880 = vmatprep.subr.mxu0 0.0
        %881 = vmatpush1.msra.mxu0 %v849
        %882 = vmatprep.subr.mxu0 0.0
        %883 = vmatpush1.msra.mxu0 0.0
        %884 = vmatprep.subr.mxu0 0.0
        %885 = vmatpush1.msra.mxu0 0.0
        %886 = vmatprep.subr.mxu0 0.0
        %887 = vmatpush1.msra.mxu0 0.0
        %888 = vmatprep.subr.mxu0 0.0
        %889 = vmatpush1.msra.mxu0 0.0
        %890 = vmatprep.subr.mxu0 0.0
        %891 = vmatpush1.msra.mxu0 0.0
        %892 = vmatprep.subr.mxu0 0.0
        %893 = vmatpush1.msra.mxu0 0.0
        %894 = vmatprep.subr.mxu0 0.0
        %895 = vmatpush1.msra.mxu0 0.0
        %896 = vmatprep.subr.mxu0 0.0
        %897 = vmatpush1.msra.mxu0 0.0
        %898 = vmatprep.subr.mxu0 0.0
        %899 = vmatpush1.msra.mxu0 0.0
        %900 = vmatprep.subr.mxu0 0.0
        %901 = vmatpush1.msra.mxu0 0.0
        %902 = vmatprep.subr.mxu0 0.0
        %903 = vmatpush1.msra.mxu0 0.0
        %904 = vmatprep.subr.mxu0 0.0
        %905 = vmatpush1.msra.mxu0 0.0
        %906 = vmatprep.subr.mxu0 0.0
        %907 = vmatpush1.msra.mxu0 0.0
        %908 = vmatprep.subr.mxu0 0.0
        %909 = vmatpush1.msra.mxu0 0.0
        %910 = vmatprep.subr.mxu0 0.0
        %911 = vmatpush1.msra.mxu0 0.0
        %912 = vmatprep.subr.mxu0 0.0
        %913 = vmatpush1.msra.mxu0 0.0
        %914 = vmatprep.mubr.f32.mxu0 0.0
        %915 = vmatmul.mubr.f32.gmra.mrb[0].mxu0 %v833
        %v916 = vpop.f32.mrb[0].mxu0
        %v917 = vadd.f32 0.0, %v916
        %v918 = vpop.f32.mrb[0].mxu0
        %919 = vdwg.mxu0
        %v920 = vadd.f32 %v832, %v917
        %v921 = vmul.f32 %v920, 2.0
        %v922 = vsel %vm481, %v921, %v920
        %v923 = vxor.u32 %v922, 2147483648
        %v924 = vmul.f32 %v923, 1.442695
        %v925 = vpow.pop %v924
        %v926 = vadd.f32 %v925, 1.0
        %v927 = vrcp.pop %v926
        %v928 = vmul.f32 1.0, %v927
        %v929 = vmul.f32 %v928, 2.0
        %v930 = vsub.f32 %v929, 1.0
        %v931 = vsel %vm481, %v930, %v928
        %932 = vrot.lane.b32.xlu0 %v931, 96
        %v933 = vpop.permute.xlu0 %932
        %934 = vrot.lane.b32.xlu0 %v931, 64
        %v935 = vpop.permute.xlu0 %934
        %936 = vrot.lane.b32.xlu0 %v931, 32
        %v937 = vpop.permute.xlu0 %936
        %v938 = vld [vmem:[#allocation5] sm:$0xff]
        %v939 = vmul.f32 %v933, %v938
        %v940 = vmul.f32 %v931, %v935
        %v941 = vadd.f32 %v939, %v940
        %v942 = vtanh.pop %v941
        %v943 = vmul.f32 %v937, %v942
        %944 = vst [vmem:[#allocation5] sm:$0xff] %v941
        %945 = vst [vmem:[#allocation4] sm:$0xff] %v943
        %s946 = scalar_lea.vmem [#allocation2], 24
        %947 = vst [vmem:[%s946] sm:$0xff] %v943
        %s948 = scalar_lea.vmem [#allocation3], 32
        %v949 = vld [vmem:[%s948] sm:$0xff]
        %v950 = vld [vmem:[#allocation4] sm:$0xff]
        %v951 = vld [vmem:[%s270] sm:$0xff]
        %v952 = vld [vmem:[%s270 + $0x8] sm:$0xff]
        %v953 = vld [vmem:[%s270 + $0x10] sm:$0xff]
        %v954 = vld [vmem:[%s270 + $0x18] sm:$0xff]
        %v955 = vld [vmem:[%s270 + $0x20] sm:$0xff]
        %v956 = vld [vmem:[%s270 + $0x28] sm:$0xff]
        %v957 = vld [vmem:[%s270 + $0x30] sm:$0xff]
        %v958 = vld [vmem:[%s270 + $0x38] sm:$0xff]
        %v959 = vld [vmem:[%s270 + $0x40] sm:$0xff]
        %v960 = vld [vmem:[%s270 + $0x48] sm:$0xff]
        %v961 = vld [vmem:[%s270 + $0x50] sm:$0xff]
        %v962 = vld [vmem:[%s270 + $0x58] sm:$0xff]
        %v963 = vld [vmem:[%s270 + $0x60] sm:$0xff]
        %v964 = vld [vmem:[%s270 + $0x68] sm:$0xff]
        %v965 = vld [vmem:[%s270 + $0x70] sm:$0xff]
        %v966 = vld [vmem:[%s270 + $0x78] sm:$0xff]
        %967 = vmatprep.subr.mxu0 0.0
        %968 = vmatpush1.msra.mxu0 %v951
        %969 = vmatprep.subr.mxu0 0.0
        %970 = vmatpush1.msra.mxu0 %v952
        %971 = vmatprep.subr.mxu0 0.0
        %972 = vmatpush1.msra.mxu0 %v953
        %973 = vmatprep.subr.mxu0 0.0
        %974 = vmatpush1.msra.mxu0 %v954
        %975 = vmatprep.subr.mxu0 0.0
        %976 = vmatpush1.msra.mxu0 %v955
        %977 = vmatprep.subr.mxu0 0.0
        %978 = vmatpush1.msra.mxu0 %v956
        %979 = vmatprep.subr.mxu0 0.0
        %980 = vmatpush1.msra.mxu0 %v957
        %981 = vmatprep.subr.mxu0 0.0
        %982 = vmatpush1.msra.mxu0 %v958
        %983 = vmatprep.subr.mxu0 0.0
        %984 = vmatpush1.msra.mxu0 %v959
        %985 = vmatprep.subr.mxu0 0.0
        %986 = vmatpush1.msra.mxu0 %v960
        %987 = vmatprep.subr.mxu0 0.0
        %988 = vmatpush1.msra.mxu0 %v961
        %989 = vmatprep.subr.mxu0 0.0
        %990 = vmatpush1.msra.mxu0 %v962
        %991 = vmatprep.subr.mxu0 0.0
        %992 = vmatpush1.msra.mxu0 %v963
        %993 = vmatprep.subr.mxu0 0.0
        %994 = vmatpush1.msra.mxu0 %v964
        %995 = vmatprep.subr.mxu0 0.0
        %996 = vmatpush1.msra.mxu0 %v965
        %997 = vmatprep.subr.mxu0 0.0
        %998 = vmatpush1.msra.mxu0 %v966
        %999 = vmatprep.subr.mxu0 0.0
        %1000 = vmatpush1.msra.mxu0 0.0
        %1001 = vmatprep.subr.mxu0 0.0
        %1002 = vmatpush1.msra.mxu0 0.0
        %1003 = vmatprep.subr.mxu0 0.0
        %1004 = vmatpush1.msra.mxu0 0.0
        %1005 = vmatprep.subr.mxu0 0.0
        %1006 = vmatpush1.msra.mxu0 0.0
        %1007 = vmatprep.subr.mxu0 0.0
        %1008 = vmatpush1.msra.mxu0 0.0
        %1009 = vmatprep.subr.mxu0 0.0
        %1010 = vmatpush1.msra.mxu0 0.0
        %1011 = vmatprep.subr.mxu0 0.0
        %1012 = vmatpush1.msra.mxu0 0.0
        %1013 = vmatprep.subr.mxu0 0.0
        %1014 = vmatpush1.msra.mxu0 0.0
        %1015 = vmatprep.subr.mxu0 0.0
        %1016 = vmatpush1.msra.mxu0 0.0
        %1017 = vmatprep.subr.mxu0 0.0
        %1018 = vmatpush1.msra.mxu0 0.0
        %1019 = vmatprep.subr.mxu0 0.0
        %1020 = vmatpush1.msra.mxu0 0.0
        %1021 = vmatprep.subr.mxu0 0.0
        %1022 = vmatpush1.msra.mxu0 0.0
        %1023 = vmatprep.subr.mxu0 0.0
        %1024 = vmatpush1.msra.mxu0 0.0
        %1025 = vmatprep.subr.mxu0 0.0
        %1026 = vmatpush1.msra.mxu0 0.0
        %1027 = vmatprep.subr.mxu0 0.0
        %1028 = vmatpush1.msra.mxu0 0.0
        %1029 = vmatprep.subr.mxu0 0.0
        %1030 = vmatpush1.msra.mxu0 0.0
        %1031 = vmatprep.mubr.f32.mxu0 0.0
        %1032 = vmatmul.mubr.f32.gmra.mrb[0].mxu0 %v950
        %v1033 = vpop.f32.mrb[0].mxu0
        %v1034 = vadd.f32 0.0, %v1033
        %v1035 = vpop.f32.mrb[0].mxu0
        %1036 = vdwg.mxu0
        %v1037 = vadd.f32 %v949, %v1034
        %v1038 = vmul.f32 %v1037, 2.0
        %v1039 = vsel %vm481, %v1038, %v1037
        %v1040 = vxor.u32 %v1039, 2147483648
        %v1041 = vmul.f32 %v1040, 1.442695
        %v1042 = vpow.pop %v1041
        %v1043 = vadd.f32 %v1042, 1.0
        %v1044 = vrcp.pop %v1043
        %v1045 = vmul.f32 1.0, %v1044
        %v1046 = vmul.f32 %v1045, 2.0
        %v1047 = vsub.f32 %v1046, 1.0
        %v1048 = vsel %vm481, %v1047, %v1045
        %1049 = vrot.lane.b32.xlu0 %v1048, 96
        %v1050 = vpop.permute.xlu0 %1049
        %1051 = vrot.lane.b32.xlu0 %v1048, 64
        %v1052 = vpop.permute.xlu0 %1051
        %1053 = vrot.lane.b32.xlu0 %v1048, 32
        %v1054 = vpop.permute.xlu0 %1053
        %v1055 = vld [vmem:[#allocation5] sm:$0xff]
        %v1056 = vmul.f32 %v1050, %v1055
        %v1057 = vmul.f32 %v1048, %v1052
        %v1058 = vadd.f32 %v1056, %v1057
        %v1059 = vtanh.pop %v1058
        %v1060 = vmul.f32 %v1054, %v1059
        %1061 = vst [vmem:[#allocation5] sm:$0xff] %v1058
        %1062 = vst [vmem:[#allocation4] sm:$0xff] %v1060
        %s1063 = scalar_lea.vmem [#allocation2], 32
        %1064 = vst [vmem:[%s1063] sm:$0xff] %v1060
        %s1065 = scalar_lea.vmem [#allocation3], 40
        %v1066 = vld [vmem:[%s1065] sm:$0xff]
        %v1067 = vld [vmem:[#allocation4] sm:$0xff]
        %v1068 = vld [vmem:[%s270] sm:$0xff]
        %v1069 = vld [vmem:[%s270 + $0x8] sm:$0xff]
        %v1070 = vld [vmem:[%s270 + $0x10] sm:$0xff]
        %v1071 = vld [vmem:[%s270 + $0x18] sm:$0xff]
        %v1072 = vld [vmem:[%s270 + $0x20] sm:$0xff]
        %v1073 = vld [vmem:[%s270 + $0x28] sm:$0xff]
        %v1074 = vld [vmem:[%s270 + $0x30] sm:$0xff]
        %v1075 = vld [vmem:[%s270 + $0x38] sm:$0xff]
        %v1076 = vld [vmem:[%s270 + $0x40] sm:$0xff]
        %v1077 = vld [vmem:[%s270 + $0x48] sm:$0xff]
        %v1078 = vld [vmem:[%s270 + $0x50] sm:$0xff]
        %v1079 = vld [vmem:[%s270 + $0x58] sm:$0xff]
        %v1080 = vld [vmem:[%s270 + $0x60] sm:$0xff]
        %v1081 = vld [vmem:[%s270 + $0x68] sm:$0xff]
        %v1082 = vld [vmem:[%s270 + $0x70] sm:$0xff]
        %v1083 = vld [vmem:[%s270 + $0x78] sm:$0xff]
        %1084 = vmatprep.subr.mxu0 0.0
        %1085 = vmatpush1.msra.mxu0 %v1068
        %1086 = vmatprep.subr.mxu0 0.0
        %1087 = vmatpush1.msra.mxu0 %v1069
        %1088 = vmatprep.subr.mxu0 0.0
        %1089 = vmatpush1.msra.mxu0 %v1070
        %1090 = vmatprep.subr.mxu0 0.0
        %1091 = vmatpush1.msra.mxu0 %v1071
        %1092 = vmatprep.subr.mxu0 0.0
        %1093 = vmatpush1.msra.mxu0 %v1072
        %1094 = vmatprep.subr.mxu0 0.0
        %1095 = vmatpush1.msra.mxu0 %v1073
        %1096 = vmatprep.subr.mxu0 0.0
        %1097 = vmatpush1.msra.mxu0 %v1074
        %1098 = vmatprep.subr.mxu0 0.0
        %1099 = vmatpush1.msra.mxu0 %v1075
        %1100 = vmatprep.subr.mxu0 0.0
        %1101 = vmatpush1.msra.mxu0 %v1076
        %1102 = vmatprep.subr.mxu0 0.0
        %1103 = vmatpush1.msra.mxu0 %v1077
        %1104 = vmatprep.subr.mxu0 0.0
        %1105 = vmatpush1.msra.mxu0 %v1078
        %1106 = vmatprep.subr.mxu0 0.0
        %1107 = vmatpush1.msra.mxu0 %v1079
        %1108 = vmatprep.subr.mxu0 0.0
        %1109 = vmatpush1.msra.mxu0 %v1080
        %1110 = vmatprep.subr.mxu0 0.0
        %1111 = vmatpush1.msra.mxu0 %v1081
        %1112 = vmatprep.subr.mxu0 0.0
        %1113 = vmatpush1.msra.mxu0 %v1082
        %1114 = vmatprep.subr.mxu0 0.0
        %1115 = vmatpush1.msra.mxu0 %v1083
        %1116 = vmatprep.subr.mxu0 0.0
        %1117 = vmatpush1.msra.mxu0 0.0
        %1118 = vmatprep.subr.mxu0 0.0
        %1119 = vmatpush1.msra.mxu0 0.0
        %1120 = vmatprep.subr.mxu0 0.0
        %1121 = vmatpush1.msra.mxu0 0.0
        %1122 = vmatprep.subr.mxu0 0.0
        %1123 = vmatpush1.msra.mxu0 0.0
        %1124 = vmatprep.subr.mxu0 0.0
        %1125 = vmatpush1.msra.mxu0 0.0
        %1126 = vmatprep.subr.mxu0 0.0
        %1127 = vmatpush1.msra.mxu0 0.0
        %1128 = vmatprep.subr.mxu0 0.0
        %1129 = vmatpush1.msra.mxu0 0.0
        %1130 = vmatprep.subr.mxu0 0.0
        %1131 = vmatpush1.msra.mxu0 0.0
        %1132 = vmatprep.subr.mxu0 0.0
        %1133 = vmatpush1.msra.mxu0 0.0
        %1134 = vmatprep.subr.mxu0 0.0
        %1135 = vmatpush1.msra.mxu0 0.0
        %1136 = vmatprep.subr.mxu0 0.0
        %1137 = vmatpush1.msra.mxu0 0.0
        %1138 = vmatprep.subr.mxu0 0.0
        %1139 = vmatpush1.msra.mxu0 0.0
        %1140 = vmatprep.subr.mxu0 0.0
        %1141 = vmatpush1.msra.mxu0 0.0
        %1142 = vmatprep.subr.mxu0 0.0
        %1143 = vmatpush1.msra.mxu0 0.0
        %1144 = vmatprep.subr.mxu0 0.0
        %1145 = vmatpush1.msra.mxu0 0.0
        %1146 = vmatprep.subr.mxu0 0.0
        %1147 = vmatpush1.msra.mxu0 0.0
        %1148 = vmatprep.mubr.f32.mxu0 0.0
        %1149 = vmatmul.mubr.f32.gmra.mrb[0].mxu0 %v1067
        %v1150 = vpop.f32.mrb[0].mxu0
        %v1151 = vadd.f32 0.0, %v1150
        %v1152 = vpop.f32.mrb[0].mxu0
        %1153 = vdwg.mxu0
        %v1154 = vadd.f32 %v1066, %v1151
        %v1155 = vmul.f32 %v1154, 2.0
        %v1156 = vsel %vm481, %v1155, %v1154
        %v1157 = vxor.u32 %v1156, 2147483648
        %v1158 = vmul.f32 %v1157, 1.442695
        %v1159 = vpow.pop %v1158
        %v1160 = vadd.f32 %v1159, 1.0
        %v1161 = vrcp.pop %v1160
        %v1162 = vmul.f32 1.0, %v1161
        %v1163 = vmul.f32 %v1162, 2.0
        %v1164 = vsub.f32 %v1163, 1.0
        %v1165 = vsel %vm481, %v1164, %v1162
        %1166 = vrot.lane.b32.xlu0 %v1165, 96
        %v1167 = vpop.permute.xlu0 %1166
        %1168 = vrot.lane.b32.xlu0 %v1165, 64
        %v1169 = vpop.permute.xlu0 %1168
        %1170 = vrot.lane.b32.xlu0 %v1165, 32
        %v1171 = vpop.permute.xlu0 %1170
        %v1172 = vld [vmem:[#allocation5] sm:$0xff]
        %v1173 = vmul.f32 %v1167, %v1172
        %v1174 = vmul.f32 %v1165, %v1169
        %v1175 = vadd.f32 %v1173, %v1174
        %v1176 = vtanh.pop %v1175
        %v1177 = vmul.f32 %v1171, %v1176
        %1178 = vst [vmem:[#allocation5] sm:$0xff] %v1175
        %1179 = vst [vmem:[#allocation4] sm:$0xff] %v1177
        %s1180 = scalar_lea.vmem [#allocation2], 40
        %1181 = vst [vmem:[%s1180] sm:$0xff] %v1177
        %s1182 = scalar_lea.vmem [#allocation3], 48
        %v1183 = vld [vmem:[%s1182] sm:$0xff]
        %v1184 = vld [vmem:[#allocation4] sm:$0xff]
        %v1185 = vld [vmem:[%s270] sm:$0xff]
        %v1186 = vld [vmem:[%s270 + $0x8] sm:$0xff]
        %v1187 = vld [vmem:[%s270 + $0x10] sm:$0xff]
        %v1188 = vld [vmem:[%s270 + $0x18] sm:$0xff]
        %v1189 = vld [vmem:[%s270 + $0x20] sm:$0xff]
        %v1190 = vld [vmem:[%s270 + $0x28] sm:$0xff]
        %v1191 = vld [vmem:[%s270 + $0x30] sm:$0xff]
        %v1192 = vld [vmem:[%s270 + $0x38] sm:$0xff]
        %v1193 = vld [vmem:[%s270 + $0x40] sm:$0xff]
        %v1194 = vld [vmem:[%s270 + $0x48] sm:$0xff]
        %v1195 = vld [vmem:[%s270 + $0x50] sm:$0xff]
        %v1196 = vld [vmem:[%s270 + $0x58] sm:$0xff]
        %v1197 = vld [vmem:[%s270 + $0x60] sm:$0xff]
        %v1198 = vld [vmem:[%s270 + $0x68] sm:$0xff]
        %v1199 = vld [vmem:[%s270 + $0x70] sm:$0xff]
        %v1200 = vld [vmem:[%s270 + $0x78] sm:$0xff]
        %1201 = vmatprep.subr.mxu0 0.0
        %1202 = vmatpush1.msra.mxu0 %v1185
        %1203 = vmatprep.subr.mxu0 0.0
        %1204 = vmatpush1.msra.mxu0 %v1186
        %1205 = vmatprep.subr.mxu0 0.0
        %1206 = vmatpush1.msra.mxu0 %v1187
        %1207 = vmatprep.subr.mxu0 0.0
        %1208 = vmatpush1.msra.mxu0 %v1188
        %1209 = vmatprep.subr.mxu0 0.0
        %1210 = vmatpush1.msra.mxu0 %v1189
        %1211 = vmatprep.subr.mxu0 0.0
        %1212 = vmatpush1.msra.mxu0 %v1190
        %1213 = vmatprep.subr.mxu0 0.0
        %1214 = vmatpush1.msra.mxu0 %v1191
        %1215 = vmatprep.subr.mxu0 0.0
        %1216 = vmatpush1.msra.mxu0 %v1192
        %1217 = vmatprep.subr.mxu0 0.0
        %1218 = vmatpush1.msra.mxu0 %v1193
        %1219 = vmatprep.subr.mxu0 0.0
        %1220 = vmatpush1.msra.mxu0 %v1194
        %1221 = vmatprep.subr.mxu0 0.0
        %1222 = vmatpush1.msra.mxu0 %v1195
        %1223 = vmatprep.subr.mxu0 0.0
        %1224 = vmatpush1.msra.mxu0 %v1196
        %1225 = vmatprep.subr.mxu0 0.0
        %1226 = vmatpush1.msra.mxu0 %v1197
        %1227 = vmatprep.subr.mxu0 0.0
        %1228 = vmatpush1.msra.mxu0 %v1198
        %1229 = vmatprep.subr.mxu0 0.0
        %1230 = vmatpush1.msra.mxu0 %v1199
        %1231 = vmatprep.subr.mxu0 0.0
        %1232 = vmatpush1.msra.mxu0 %v1200
        %1233 = vmatprep.subr.mxu0 0.0
        %1234 = vmatpush1.msra.mxu0 0.0
        %1235 = vmatprep.subr.mxu0 0.0
        %1236 = vmatpush1.msra.mxu0 0.0
        %1237 = vmatprep.subr.mxu0 0.0
        %1238 = vmatpush1.msra.mxu0 0.0
        %1239 = vmatprep.subr.mxu0 0.0
        %1240 = vmatpush1.msra.mxu0 0.0
        %1241 = vmatprep.subr.mxu0 0.0
        %1242 = vmatpush1.msra.mxu0 0.0
        %1243 = vmatprep.subr.mxu0 0.0
        %1244 = vmatpush1.msra.mxu0 0.0
        %1245 = vmatprep.subr.mxu0 0.0
        %1246 = vmatpush1.msra.mxu0 0.0
        %1247 = vmatprep.subr.mxu0 0.0
        %1248 = vmatpush1.msra.mxu0 0.0
        %1249 = vmatprep.subr.mxu0 0.0
        %1250 = vmatpush1.msra.mxu0 0.0
        %1251 = vmatprep.subr.mxu0 0.0
        %1252 = vmatpush1.msra.mxu0 0.0
        %1253 = vmatprep.subr.mxu0 0.0
        %1254 = vmatpush1.msra.mxu0 0.0
        %1255 = vmatprep.subr.mxu0 0.0
        %1256 = vmatpush1.msra.mxu0 0.0
        %1257 = vmatprep.subr.mxu0 0.0
        %1258 = vmatpush1.msra.mxu0 0.0
        %1259 = vmatprep.subr.mxu0 0.0
        %1260 = vmatpush1.msra.mxu0 0.0
        %1261 = vmatprep.subr.mxu0 0.0
        %1262 = vmatpush1.msra.mxu0 0.0
        %1263 = vmatprep.subr.mxu0 0.0
        %1264 = vmatpush1.msra.mxu0 0.0
        %1265 = vmatprep.mubr.f32.mxu0 0.0
        %1266 = vmatmul.mubr.f32.gmra.mrb[0].mxu0 %v1184
        %v1267 = vpop.f32.mrb[0].mxu0
        %v1268 = vadd.f32 0.0, %v1267
        %v1269 = vpop.f32.mrb[0].mxu0
        %1270 = vdwg.mxu0
        %v1271 = vadd.f32 %v1183, %v1268
        %v1272 = vmul.f32 %v1271, 2.0
        %v1273 = vsel %vm481, %v1272, %v1271
        %v1274 = vxor.u32 %v1273, 2147483648
        %v1275 = vmul.f32 %v1274, 1.442695
        %v1276 = vpow.pop %v1275
        %v1277 = vadd.f32 %v1276, 1.0
        %v1278 = vrcp.pop %v1277
        %v1279 = vmul.f32 1.0, %v1278
        %v1280 = vmul.f32 %v1279, 2.0
        %v1281 = vsub.f32 %v1280, 1.0
        %v1282 = vsel %vm481, %v1281, %v1279
        %1283 = vrot.lane.b32.xlu0 %v1282, 96
        %v1284 = vpop.permute.xlu0 %1283
        %1285 = vrot.lane.b32.xlu0 %v1282, 64
        %v1286 = vpop.permute.xlu0 %1285
        %1287 = vrot.lane.b32.xlu0 %v1282, 32
        %v1288 = vpop.permute.xlu0 %1287
        %v1289 = vld [vmem:[#allocation5] sm:$0xff]
        %v1290 = vmul.f32 %v1284, %v1289
        %v1291 = vmul.f32 %v1282, %v1286
        %v1292 = vadd.f32 %v1290, %v1291
        %v1293 = vtanh.pop %v1292
        %v1294 = vmul.f32 %v1288, %v1293
        %1295 = vst [vmem:[#allocation5] sm:$0xff] %v1292
        %1296 = vst [vmem:[#allocation4] sm:$0xff] %v1294
        %s1297 = scalar_lea.vmem [#allocation2], 48
        %1298 = vst [vmem:[%s1297] sm:$0xff] %v1294
        %s1299 = scalar_lea.vmem [#allocation3], 56
        %v1300 = vld [vmem:[%s1299] sm:$0xff]
        %v1301 = vld [vmem:[#allocation4] sm:$0xff]
        %v1302 = vld [vmem:[%s270] sm:$0xff]
        %v1303 = vld [vmem:[%s270 + $0x8] sm:$0xff]
        %v1304 = vld [vmem:[%s270 + $0x10] sm:$0xff]
        %v1305 = vld [vmem:[%s270 + $0x18] sm:$0xff]
        %v1306 = vld [vmem:[%s270 + $0x20] sm:$0xff]
        %v1307 = vld [vmem:[%s270 + $0x28] sm:$0xff]
        %v1308 = vld [vmem:[%s270 + $0x30] sm:$0xff]
        %v1309 = vld [vmem:[%s270 + $0x38] sm:$0xff]
        %v1310 = vld [vmem:[%s270 + $0x40] sm:$0xff]
        %v1311 = vld [vmem:[%s270 + $0x48] sm:$0xff]
        %v1312 = vld [vmem:[%s270 + $0x50] sm:$0xff]
        %v1313 = vld [vmem:[%s270 + $0x58] sm:$0xff]
        %v1314 = vld [vmem:[%s270 + $0x60] sm:$0xff]
        %v1315 = vld [vmem:[%s270 + $0x68] sm:$0xff]
        %v1316 = vld [vmem:[%s270 + $0x70] sm:$0xff]
        %v1317 = vld [vmem:[%s270 + $0x78] sm:$0xff]
        %1318 = vmatprep.subr.mxu0 0.0
        %1319 = vmatpush1.msra.mxu0 %v1302
        %1320 = vmatprep.subr.mxu0 0.0
        %1321 = vmatpush1.msra.mxu0 %v1303
        %1322 = vmatprep.subr.mxu0 0.0
        %1323 = vmatpush1.msra.mxu0 %v1304
        %1324 = vmatprep.subr.mxu0 0.0
        %1325 = vmatpush1.msra.mxu0 %v1305
        %1326 = vmatprep.subr.mxu0 0.0
        %1327 = vmatpush1.msra.mxu0 %v1306
        %1328 = vmatprep.subr.mxu0 0.0
        %1329 = vmatpush1.msra.mxu0 %v1307
        %1330 = vmatprep.subr.mxu0 0.0
        %1331 = vmatpush1.msra.mxu0 %v1308
        %1332 = vmatprep.subr.mxu0 0.0
        %1333 = vmatpush1.msra.mxu0 %v1309
        %1334 = vmatprep.subr.mxu0 0.0
        %1335 = vmatpush1.msra.mxu0 %v1310
        %1336 = vmatprep.subr.mxu0 0.0
        %1337 = vmatpush1.msra.mxu0 %v1311
        %1338 = vmatprep.subr.mxu0 0.0
        %1339 = vmatpush1.msra.mxu0 %v1312
        %1340 = vmatprep.subr.mxu0 0.0
        %1341 = vmatpush1.msra.mxu0 %v1313
        %1342 = vmatprep.subr.mxu0 0.0
        %1343 = vmatpush1.msra.mxu0 %v1314
        %1344 = vmatprep.subr.mxu0 0.0
        %1345 = vmatpush1.msra.mxu0 %v1315
        %1346 = vmatprep.subr.mxu0 0.0
        %1347 = vmatpush1.msra.mxu0 %v1316
        %1348 = vmatprep.subr.mxu0 0.0
        %1349 = vmatpush1.msra.mxu0 %v1317
        %1350 = vmatprep.subr.mxu0 0.0
        %1351 = vmatpush1.msra.mxu0 0.0
        %1352 = vmatprep.subr.mxu0 0.0
        %1353 = vmatpush1.msra.mxu0 0.0
        %1354 = vmatprep.subr.mxu0 0.0
        %1355 = vmatpush1.msra.mxu0 0.0
        %1356 = vmatprep.subr.mxu0 0.0
        %1357 = vmatpush1.msra.mxu0 0.0
        %1358 = vmatprep.subr.mxu0 0.0
        %1359 = vmatpush1.msra.mxu0 0.0
        %1360 = vmatprep.subr.mxu0 0.0
        %1361 = vmatpush1.msra.mxu0 0.0
        %1362 = vmatprep.subr.mxu0 0.0
        %1363 = vmatpush1.msra.mxu0 0.0
        %1364 = vmatprep.subr.mxu0 0.0
        %1365 = vmatpush1.msra.mxu0 0.0
        %1366 = vmatprep.subr.mxu0 0.0
        %1367 = vmatpush1.msra.mxu0 0.0
        %1368 = vmatprep.subr.mxu0 0.0
        %1369 = vmatpush1.msra.mxu0 0.0
        %1370 = vmatprep.subr.mxu0 0.0
        %1371 = vmatpush1.msra.mxu0 0.0
        %1372 = vmatprep.subr.mxu0 0.0
        %1373 = vmatpush1.msra.mxu0 0.0
        %1374 = vmatprep.subr.mxu0 0.0
        %1375 = vmatpush1.msra.mxu0 0.0
        %1376 = vmatprep.subr.mxu0 0.0
        %1377 = vmatpush1.msra.mxu0 0.0
        %1378 = vmatprep.subr.mxu0 0.0
        %1379 = vmatpush1.msra.mxu0 0.0
        %1380 = vmatprep.subr.mxu0 0.0
        %1381 = vmatpush1.msra.mxu0 0.0
        %1382 = vmatprep.mubr.f32.mxu0 0.0
        %1383 = vmatmul.mubr.f32.gmra.mrb[0].mxu0 %v1301
        %v1384 = vpop.f32.mrb[0].mxu0
        %v1385 = vadd.f32 0.0, %v1384
        %v1386 = vpop.f32.mrb[0].mxu0
        %1387 = vdwg.mxu0
        %v1388 = vadd.f32 %v1300, %v1385
        %v1389 = vmul.f32 %v1388, 2.0
        %v1390 = vsel %vm481, %v1389, %v1388
        %v1391 = vxor.u32 %v1390, 2147483648
        %v1392 = vmul.f32 %v1391, 1.442695
        %v1393 = vpow.pop %v1392
        %v1394 = vadd.f32 %v1393, 1.0
        %v1395 = vrcp.pop %v1394
        %v1396 = vmul.f32 1.0, %v1395
        %v1397 = vmul.f32 %v1396, 2.0
        %v1398 = vsub.f32 %v1397, 1.0
        %v1399 = vsel %vm481, %v1398, %v1396
        %1400 = vrot.lane.b32.xlu0 %v1399, 96
        %v1401 = vpop.permute.xlu0 %1400
        %1402 = vrot.lane.b32.xlu0 %v1399, 64
        %v1403 = vpop.permute.xlu0 %1402
        %1404 = vrot.lane.b32.xlu0 %v1399, 32
        %v1405 = vpop.permute.xlu0 %1404
        %v1406 = vld [vmem:[#allocation5] sm:$0xff]
        %v1407 = vmul.f32 %v1401, %v1406
        %v1408 = vmul.f32 %v1399, %v1403
        %v1409 = vadd.f32 %v1407, %v1408
        %v1410 = vtanh.pop %v1409
        %v1411 = vmul.f32 %v1405, %v1410
        %1412 = vst [vmem:[#allocation5] sm:$0xff] %v1409
        %1413 = vst [vmem:[#allocation4] sm:$0xff] %v1411
        %s1414 = scalar_lea.vmem [#allocation2], 56
        %1415 = vst [vmem:[%s1414] sm:$0xff] %v1411
        %v1416 = vld [vmem:[#allocation4] sm:$0xff]
        %v1417 = vld [vmem:[#allocation11] sm:$0xff]
        %v1418 = vld [vmem:[#allocation11 + $0x8] sm:$0xff]
        %v1419 = vld [vmem:[#allocation11 + $0x10] sm:$0xff]
        %v1420 = vld [vmem:[#allocation11 + $0x18] sm:$0xff]
        %v1421 = vld [vmem:[#allocation11 + $0x20] sm:$0xff]
        %v1422 = vld [vmem:[#allocation11 + $0x28] sm:$0xff]
        %v1423 = vld [vmem:[#allocation11 + $0x30] sm:$0xff]
        %v1424 = vld [vmem:[#allocation11 + $0x38] sm:$0xff]
        %v1425 = vld [vmem:[#allocation11 + $0x40] sm:$0xff]
        %v1426 = vld [vmem:[#allocation11 + $0x48] sm:$0xff]
        %v1427 = vld [vmem:[#allocation11 + $0x50] sm:$0xff]
        %v1428 = vld [vmem:[#allocation11 + $0x58] sm:$0xff]
        %v1429 = vld [vmem:[#allocation11 + $0x60] sm:$0xff]
        %v1430 = vld [vmem:[#allocation11 + $0x68] sm:$0xff]
        %v1431 = vld [vmem:[#allocation11 + $0x70] sm:$0xff]
        %v1432 = vld [vmem:[#allocation11 + $0x78] sm:$0xff]
        %v1433 = vld [vmem:[%s5] sm:$0x1]
        %v1435 = vlaneseq
        %v1436 = vshrl.u32 %v1435, 7
        %v1437 = vsub.s32 0, %v1436
        %v1438 = vrot.slane %v1433, %v1437
        %1440 = vmatprep.subr.mxu0 0.0
        %1441 = vmatpush1.msra.mxu0 %v1417
        %1442 = vmatprep.subr.mxu0 0.0
        %1443 = vmatpush1.msra.mxu0 %v1418
        %1444 = vmatprep.subr.mxu0 0.0
        %1445 = vmatpush1.msra.mxu0 %v1419
        %1446 = vmatprep.subr.mxu0 0.0
        %1447 = vmatpush1.msra.mxu0 %v1420
        %1448 = vmatprep.subr.mxu0 0.0
        %1449 = vmatpush1.msra.mxu0 %v1421
        %1450 = vmatprep.subr.mxu0 0.0
        %1451 = vmatpush1.msra.mxu0 %v1422
        %1452 = vmatprep.subr.mxu0 0.0
        %1453 = vmatpush1.msra.mxu0 %v1423
        %1454 = vmatprep.subr.mxu0 0.0
        %1455 = vmatpush1.msra.mxu0 %v1424
        %1456 = vmatprep.subr.mxu0 0.0
        %1457 = vmatpush1.msra.mxu0 %v1425
        %1458 = vmatprep.subr.mxu0 0.0
        %1459 = vmatpush1.msra.mxu0 %v1426
        %1460 = vmatprep.subr.mxu0 0.0
        %1461 = vmatpush1.msra.mxu0 %v1427
        %1462 = vmatprep.subr.mxu0 0.0
        %1463 = vmatpush1.msra.mxu0 %v1428
        %1464 = vmatprep.subr.mxu0 0.0
        %1465 = vmatpush1.msra.mxu0 %v1429
        %1466 = vmatprep.subr.mxu0 0.0
        %1467 = vmatpush1.msra.mxu0 %v1430
        %1468 = vmatprep.subr.mxu0 0.0
        %1469 = vmatpush1.msra.mxu0 %v1431
        %1470 = vmatprep.subr.mxu0 0.0
        %1471 = vmatpush1.msra.mxu0 %v1432
        %1472 = vmatprep.subr.mxu0 0.0
        %1473 = vmatpush1.msra.mxu0 0.0
        %1474 = vmatprep.subr.mxu0 0.0
        %1475 = vmatpush1.msra.mxu0 0.0
        %1476 = vmatprep.subr.mxu0 0.0
        %1477 = vmatpush1.msra.mxu0 0.0
        %1478 = vmatprep.subr.mxu0 0.0
        %1479 = vmatpush1.msra.mxu0 0.0
        %1480 = vmatprep.subr.mxu0 0.0
        %1481 = vmatpush1.msra.mxu0 0.0
        %1482 = vmatprep.subr.mxu0 0.0
        %1483 = vmatpush1.msra.mxu0 0.0
        %1484 = vmatprep.subr.mxu0 0.0
        %1485 = vmatpush1.msra.mxu0 0.0
        %1486 = vmatprep.subr.mxu0 0.0
        %1487 = vmatpush1.msra.mxu0 0.0
        %1488 = vmatprep.subr.mxu0 0.0
        %1489 = vmatpush1.msra.mxu0 0.0
        %1490 = vmatprep.subr.mxu0 0.0
        %1491 = vmatpush1.msra.mxu0 0.0
        %1492 = vmatprep.subr.mxu0 0.0
        %1493 = vmatpush1.msra.mxu0 0.0
        %1494 = vmatprep.subr.mxu0 0.0
        %1495 = vmatpush1.msra.mxu0 0.0
        %1496 = vmatprep.subr.mxu0 0.0
        %1497 = vmatpush1.msra.mxu0 0.0
        %1498 = vmatprep.subr.mxu0 0.0
        %1499 = vmatpush1.msra.mxu0 0.0
        %1500 = vmatprep.subr.mxu0 0.0
        %1501 = vmatpush1.msra.mxu0 0.0
        %1502 = vmatprep.subr.mxu0 0.0
        %1503 = vmatpush1.msra.mxu0 0.0
        %1504 = vmatprep.mubr.f32.mxu0 0.0
        %1505 = vmatmul.mubr.f32.gmra.mrb[0].mxu0 %v1416
        %v1506 = vpop.f32.mrb[0].mxu0
        %v1507 = vadd.f32 %v1438, %v1506
        %v1508 = vpop.f32.mrb[0].mxu0
        %1509 = vdwg.mxu0
        %1510 = vst [vmem:[%s308] sm:$0xff] %v1507
        %s1511 = sand.u32 %s154, 1
        %s1512 = scalar_lea.sflag [#allocation8], %s1511
        %s1513 = sand.u32 %s154, 1
        %s1514 = smul.addr %s1513, 8
        %s1515 = scalar_lea.vmem [#allocation12], %s1514
        // Predicated region
        $region62: #{tpu_custom_call.1} parent=39 // pred_check
          %p1516 = pneg %p164
        $region63: #{tpu_custom_call.1} parent=39 // pred_check_branch
          %1518 = sbr.rel (%p1516) target = $region65
        $region64: #{tpu_custom_call.1} parent=39 // pred_region
          %s1520 = ssub.s32 128, 128
          %1521 = vsyncadd %s1512, %s1520
          %s1522 = smul.addr %s26, 128
          %s1523 = scalar_lea.hbm %s6, %s1522
          %s1525 = sshll.u32 %s1515, 4
          %s1526 = int_to_ptr.vmem [resolvable:$true] %s1525
          %1528 = dma.vmem_to_hbm [thread:$0]  %s1526, 128, %s1523, %s1512
        $region65: #{tpu_custom_call.1} parent=39 // pred_fallthru
          _
      $region40: #{tpu_custom_call.1} parent=5 // pred_fallthru
        _
      %p1529 = scmp.le.s32.totalorder 2, %s21
      // Predicated region
      $region66: #{tpu_custom_call.1} parent=5 // pred_check
        %p1530 = pneg %p1529
      $region67: #{tpu_custom_call.1} parent=5 // pred_check_branch
        %1532 = sbr.rel (%p1530) target = $region69
      $region68: #{tpu_custom_call.1} parent=5 // pred_region
        %s1533 = ssub.s32 %s21, 2
        // Predicated region
        $region70: #{tpu_custom_call.1} parent=68 // pred_check
          %p1534 = pneg %p170
        $region71: #{tpu_custom_call.1} parent=68 // pred_check_branch
          %1536 = sbr.rel (%p1534) target = $region73
        $region72: #{tpu_custom_call.1} parent=68 // pred_region
          %s1537 = sand.u32 %s155, 1
          %s1538 = scalar_lea.sflag [#allocation8], %s1537
          %s1539 = sand.u32 %s155, 1
          %s1540 = smul.addr %s1539, 8
          %s1541 = scalar_lea.vmem [#allocation12], %s1540
          %1542 = dma.done %s1538, 128
        $region73: #{tpu_custom_call.1} parent=68 // pred_fallthru
          _
      $region69: #{tpu_custom_call.1} parent=5 // pred_fallthru
        _
    $region6: #{tpu_custom_call.1} parent=1 // loop_footer
      %s25 = sadd.s32 1, %s21
    $region7: #{tpu_custom_call.1} parent=1 // loop_footer_branch
      %20 = sbr.rel target = $region3
    $region8: #{tpu_custom_call.1} parent=1 // loop_exit
      _
    %1543 = vsyncpa [#allocation7], 1
    %s1544 = scalar_lea.sflag [#allocation7], 1
    %1545 = vsyncpa %s1544, 1
    %1546 = vsyncpa [#allocation10], 1
    %s1547 = scalar_lea.sflag [#allocation10], 1
    %1548 = vsyncpa %s1547, 1
    %1549 = vsyncpa [#allocation8], 1
    %s1550 = scalar_lea.sflag [#allocation8], 1
    %1551 = vsyncpa %s1550, 1

</llo_original>
